<compile_context>
chip_gen: v7x
topology: tpu7x:2x2x1
jax: 0.10.0
libtpu: 0.0.40
codegen_flags: <defaults>
</compile_context>

<pallas_src>
import jax
import jax.numpy as jnp
from jax.scipy.linalg import block_diag
from jax.experimental import pallas as pl
from jax.experimental.pallas import tpu as pltpu

C_Z = 32                      # pair channel dim
HIDDEN = 128                  # transition hidden dim (4 * C_Z)
PACK = 128 // C_Z             # logical (t,i,j) rows packed into the 128-lane dim
LANES = PACK * C_Z            # 128 (lane-dense packed channel dim)
HIDDEN_P = PACK * HIDDEN      # 512 (packed hidden dim)
LN_EPS = 1e-5

MAX_PACKED_TILE = 2048        # 8192 logical rows -> ~1 MiB f32 z block / step
MIN_PACKED_TILE = 512         # never shrink below 2048 logical rows


def _pair_transition_kernel(z_ref, m_ref, a_ref, e_ref,
                            w1_ref, b1_ref, w2_ref, b2_ref, o_ref):
    # z_ref: (tile, 128) = 4 logical rows lane-packed; m_ref: (tile, 4) mask.
    z = z_ref[...].astype(jnp.float32)
    A = a_ref[...]                                            # (128, 128) segment-mean

    # Per-32-lane-segment LayerNorm statistics on the (otherwise idle) MXU;
    # stable two-pass form E[(z - mu)^2].
    mu = jnp.dot(z, A, preferred_element_type=jnp.float32)
    d = z - mu
    var = jnp.dot(d * d, A, preferred_element_type=jnp.float32)
    zn = d * jax.lax.rsqrt(var + LN_EPS)      # gamma/beta folded into w1/b1

    # Transition MLP on block-diagonal packed weights (K=128, lane-dense, f32 acc).
    h = jnp.dot(zn, w1_ref[...], preferred_element_type=jnp.float32) + b1_ref[...]
    h = jnp.maximum(h, 0.0)
    upd = jnp.dot(h, w2_ref[...], preferred_element_type=jnp.float32) + b2_ref[...]

    # Broadcast each logical row's mask across its 32-lane segment (tiny MXU op).
    m128 = jnp.dot(m_ref[...], e_ref[...], preferred_element_type=jnp.float32)

    o_ref[...] = (z + upd * m128).astype(o_ref.dtype)


def _choose_packed_tile(mp):
    """Pick the packed-row tile.

    - small problems run as a single full-extent block (no (8,128) constraint),
    - otherwise prefer a divisor of mp (no padding / slicing HBM passes) that is
      a multiple of 8, <= MAX_PACKED_TILE, >= MIN_PACKED_TILE, and gives >= 2
      grid steps (feeds both v7x TensorCores),
    - fallback: minimal padding to a multiple of 8, capped at MAX_PACKED_TILE.
    """
    if mp <= 2 * MIN_PACKED_TILE:
        return mp
    upper = min(MAX_PACKED_TILE, (mp // 2) // 8 * 8)
    for cand in range(upper, MIN_PACKED_TILE - 1, -8):
        if mp % cand == 0:
            return cand
    return min(-(-mp // 8) * 8, MAX_PACKED_TILE)


def _pack_params(params):
    """Precompute lane-packed / LN-folded constants (pure JAX, outside kernel)."""
    gamma, beta, w1, b1, w2, b2 = params
    # Fold the LayerNorm affine into the first linear.
    w1f = gamma[:, None] * w1                      # (C, H)
    b1f = b1 + beta @ w1                           # (H,)
    # Block-diagonal packed weights: 4 logical rows share the 128-lane dim.
    W1p = block_diag(*([w1f] * PACK))              # (128, 512)
    W2p = block_diag(*([w2] * PACK))               # (512, 128)
    b1p = jnp.tile(b1f, PACK)[None, :]             # (1, 512)
    b2p = jnp.tile(b2, PACK)[None, :]              # (1, 128)
    # Segment-mean matrix for per-32-lane LayerNorm statistics (runs on MXU).
    seg = jnp.arange(LANES) // C_Z
    A = (seg[None, :] == seg[:, None]).astype(jnp.float32) / C_Z       # (128, 128)
    # Mask expansion: one mask value per logical row -> its 32-lane segment.
    E = (jnp.arange(PACK)[:, None] == seg[None, :]).astype(jnp.float32)  # (4, 128)
    return (W1p, b1p, W2p, b2p, A, E)


def _masked_pair_transition(z_flat, mask_flat, packed):
    """z_flat: (M, C), mask_flat: (M,) -> (M, C)."""
    W1p, b1p, W2p, b2p, A, E = packed
    M, C = z_flat.shape
    assert C == C_Z

    mp0 = -(-M // PACK)                     # packed rows needed
    tile = _choose_packed_tile(mp0)
    n_tiles = pl.cdiv(mp0, tile)
    mp = n_tiles * tile
    m_pad = mp * PACK
    if m_pad != M:                          # rare: minimal zero pad (masked out)
        z_flat = jnp.pad(z_flat, ((0, m_pad - M), (0, 0)))
        mask_flat = jnp.pad(mask_flat, ((0, m_pad - M),))

    # Pure row-major reshape: 4 consecutive logical rows -> one lane-dense row.
    z_packed = z_flat.reshape(mp, LANES)
    mask4 = mask_flat.reshape(mp, PACK).astype(jnp.float32)

    flops = 2 * mp * LANES * HIDDEN_P * 2 + 2 * (2 * mp * LANES * LANES)
    bytes_accessed = (2 * mp * LANES * z_packed.dtype.itemsize
                      + mp * PACK * 4
                      + (W1p.size + W2p.size + A.size) * 4)
    cost = pl.CostEstimate(flops=flops, transcendentals=mp * LANES,
                           bytes_accessed=bytes_accessed)

    out = pl.pallas_call(
        _pair_transition_kernel,
        out_shape=jax.ShapeDtypeStruct((mp, LANES), z_packed.dtype),
        grid_spec=pltpu.PrefetchScalarGridSpec(
            num_scalar_prefetch=0,
            grid=(n_tiles,),
            in_specs=[
                pl.BlockSpec((tile, LANES), lambda i: (i, 0)),      # packed z rows
                pl.BlockSpec((tile, PACK), lambda i: (i, 0)),       # packed mask
                pl.BlockSpec((LANES, LANES), lambda i: (0, 0)),     # segment-mean A
                pl.BlockSpec((PACK, LANES), lambda i: (0, 0)),      # mask expander E
                pl.BlockSpec((LANES, HIDDEN_P), lambda i: (0, 0)),  # W1' (LN folded)
                pl.BlockSpec((1, HIDDEN_P), lambda i: (0, 0)),      # b1'
                pl.BlockSpec((HIDDEN_P, LANES), lambda i: (0, 0)),  # W2'
                pl.BlockSpec((1, LANES), lambda i: (0, 0)),         # b2'
            ],
            out_specs=pl.BlockSpec((tile, LANES), lambda i: (i, 0)),
        ),
        compiler_params=pltpu.CompilerParams(
            dimension_semantics=("parallel",),
            vmem_limit_bytes=48 * 1024 * 1024),
        cost_estimate=cost,
    )(z_packed, mask4, A, E, W1p, b1p, W2p, b2p)

    out = out.reshape(m_pad, C_Z)
    if m_pad != M:
        out = out[:M]
    return out


def chunk_traced_module(single, single_mask, chunk_size, params):
    """Per-template masked pair transition. single: (R, R, C), mask: (R, R)."""
    # TODO(synk): chunk_size only controls activation chunking (memory) in
    # PyTorch; it has no effect on numerics, so it is accepted and ignored.
    del chunk_size
    R1, R2, C = single.shape
    out = _masked_pair_transition(single.reshape(R1 * R2, C),
                                  single_mask.reshape(R1 * R2),
                                  _pack_params(params))
    return out.reshape(R1, R2, C)


def template_script_module_forward(z, mask, chunk_size, params):
    """Mirrors template_script_module.forward.

    z:    (..., T, R, R, C)  -- template axis at dim -4
    mask: (..., T, R, R)     -- template axis at dim -3

    The per-(t,i,j) transition is independent across templates, so
    unbind(-4) -> per-template module -> cat(-4) is fused into one call.
    """
    del chunk_size  # numerics-neutral (memory chunking only)
    C = z.shape[-1]
    packed = _pack_params(params)
    out = _masked_pair_transition(z.reshape(-1, C), mask.reshape(-1), packed)
    return out.reshape(z.shape)


def _init_params(key):
    k1, k2, k3, k4, k5, k6 = jax.random.split(key, 6)
    gamma = 1.0 + 0.1 * jax.random.normal(k5, (C_Z,), jnp.float32)
    beta = 0.05 * jax.random.normal(k6, (C_Z,), jnp.float32)
    w1 = jax.random.normal(k1, (C_Z, HIDDEN), jnp.float32) / jnp.sqrt(C_Z)
    b1 = 0.01 * jax.random.normal(k2, (HIDDEN,), jnp.float32)
    w2 = jax.random.normal(k3, (HIDDEN, C_Z), jnp.float32) / jnp.sqrt(HIDDEN)
    b2 = 0.01 * jax.random.normal(k4, (C_Z,), jnp.float32)
    return (gamma, beta, w1, b1, w2, b2)


def _reference_forward(z, mask, params):
    gamma, beta, w1, b1, w2, b2 = params
    zf = z.astype(jnp.float32)
    mu = jnp.mean(zf, axis=-1, keepdims=True)
    var = jnp.mean(jnp.square(zf - mu), axis=-1, keepdims=True)
    zn = (zf - mu) * jax.lax.rsqrt(var + LN_EPS) * gamma + beta
    h = jnp.maximum(zn @ w1 + b1, 0.0)
    upd = h @ w2 + b2
    return (zf + upd * mask[..., None].astype(jnp.float32)).astype(z.dtype)


if __name__ == "__main__":
    key = jax.random.PRNGKey(0)
    kz, km, kp = jax.random.split(key, 3)

    T, R = 2, 16  # templates, residues
    z = jax.random.normal(kz, (T, R, R, C_Z), jnp.float32)
    mask = (jax.random.uniform(km, (T, R, R)) > 0.2).astype(jnp.float32)
    chunk_size = jnp.asarray(4, jnp.int32)  # accepted, numerics-neutral

    params = _init_params(kp)

    out = jax.block_until_ready(
        template_script_module_forward(z, mask, chunk_size, params))

    assert out.shape == z.shape and out.dtype == z.dtype
    ref = _reference_forward(z, mask, params)
    assert bool(jnp.all(jnp.isfinite(out)))
    assert bool(jnp.allclose(out, ref, atol=5e-2, rtol=5e-2))
    print("KERNEL_OK")
</pallas_src>

<mosaic_0001>
module attributes {stable_mosaic.version = 11 : i64} {
  func.func @_pair_transition_kernel(%arg0: i32, %arg1: memref<128x128xf32, #tpu.memory_space<vmem>>, %arg2: memref<128x4xf32, #tpu.memory_space<vmem>>, %arg3: memref<128x128xf32, #tpu.memory_space<vmem>>, %arg4: memref<4x128xf32, #tpu.memory_space<vmem>>, %arg5: memref<128x512xf32, #tpu.memory_space<vmem>>, %arg6: memref<1x512xf32, #tpu.memory_space<vmem>>, %arg7: memref<512x128xf32, #tpu.memory_space<vmem>>, %arg8: memref<1x128xf32, #tpu.memory_space<vmem>>, %arg9: memref<128x128xf32, #tpu.memory_space<vmem>>) attributes {dimension_semantics = [#tpu.dimension_semantics<parallel>], iteration_bounds = array<i64: 1>, scalar_prefetch = 0 : i64, scratch_operands = 0 : i64, tpu.core_type = #tpu.core_type<tc>, window_params = [{transform_indices = @transform_0, window_bounds = array<i64: 128, 128>}, {transform_indices = @transform_1, window_bounds = array<i64: 128, 4>}, {pipeline_mode = #tpu.pipeline_mode<synchronous>, transform_indices = @transform_2, window_bounds = array<i64: 128, 128>}, {pipeline_mode = #tpu.pipeline_mode<synchronous>, transform_indices = @transform_3, window_bounds = array<i64: 4, 128>}, {pipeline_mode = #tpu.pipeline_mode<synchronous>, transform_indices = @transform_4, window_bounds = array<i64: 128, 512>}, {pipeline_mode = #tpu.pipeline_mode<synchronous>, transform_indices = @transform_5, window_bounds = array<i64: 1, 512>}, {pipeline_mode = #tpu.pipeline_mode<synchronous>, transform_indices = @transform_6, window_bounds = array<i64: 512, 128>}, {pipeline_mode = #tpu.pipeline_mode<synchronous>, transform_indices = @transform_7, window_bounds = array<i64: 1, 128>}, {transform_indices = @transform_8, window_bounds = array<i64: 128, 128>}]} {
    %c0 = arith.constant 0 : index
    %c0_0 = arith.constant 0 : index
    %0 = vector.load %arg1[%c0, %c0_0] : memref<128x128xf32, #tpu.memory_space<vmem>>, vector<128x128xf32>
    %c0_1 = arith.constant 0 : index
    %c0_2 = arith.constant 0 : index
    %1 = vector.load %arg3[%c0_1, %c0_2] : memref<128x128xf32, #tpu.memory_space<vmem>>, vector<128x128xf32>
    %cst = arith.constant dense<0.000000e+00> : vector<128x128xf32>
    %2 = tpu.matmul %0, %1, %cst {dimension_numbers = #tpu.dot_dimension_numbers<[1], [0], [0], [1], [0, 0, 1, 1], [], []>} : vector<128x128xf32>, vector<128x128xf32>, vector<128x128xf32> -> vector<128x128xf32>
    %3 = arith.subf %0, %2 : vector<128x128xf32>
    %4 = arith.mulf %3, %3 : vector<128x128xf32>
    %cst_3 = arith.constant dense<0.000000e+00> : vector<128x128xf32>
    %5 = tpu.matmul %4, %1, %cst_3 {dimension_numbers = #tpu.dot_dimension_numbers<[1], [0], [0], [1], [0, 0, 1, 1], [], []>} : vector<128x128xf32>, vector<128x128xf32>, vector<128x128xf32> -> vector<128x128xf32>
    %cst_4 = arith.constant 9.99999974E-6 : f32
    %6 = vector.broadcast %cst_4 : f32 to vector<128x128xf32>
    %7 = arith.addf %5, %6 : vector<128x128xf32>
    %8 = math.rsqrt %7 : vector<128x128xf32>
    %9 = arith.mulf %3, %8 : vector<128x128xf32>
    %c0_5 = arith.constant 0 : index
    %c0_6 = arith.constant 0 : index
    %10 = vector.load %arg5[%c0_5, %c0_6] : memref<128x512xf32, #tpu.memory_space<vmem>>, vector<128x512xf32>
    %cst_7 = arith.constant dense<0.000000e+00> : vector<128x512xf32>
    %11 = tpu.matmul %9, %10, %cst_7 {dimension_numbers = #tpu.dot_dimension_numbers<[1], [0], [0], [1], [0, 0, 1, 1], [], []>} : vector<128x128xf32>, vector<128x512xf32>, vector<128x512xf32> -> vector<128x512xf32>
    %c0_8 = arith.constant 0 : index
    %c0_9 = arith.constant 0 : index
    %12 = vector.load %arg6[%c0_8, %c0_9] : memref<1x512xf32, #tpu.memory_space<vmem>>, vector<1x512xf32>
    %13 = vector.broadcast %12 : vector<1x512xf32> to vector<128x512xf32>
    %14 = arith.addf %11, %13 : vector<128x512xf32>
    %cst_10 = arith.constant 0.000000e+00 : f32
    %15 = vector.broadcast %cst_10 : f32 to vector<128x512xf32>
    %16 = arith.maximumf %14, %15 : vector<128x512xf32>
    %c0_11 = arith.constant 0 : index
    %c0_12 = arith.constant 0 : index
    %17 = vector.load %arg7[%c0_11, %c0_12] : memref<512x128xf32, #tpu.memory_space<vmem>>, vector<512x128xf32>
    %cst_13 = arith.constant dense<0.000000e+00> : vector<128x128xf32>
    %18 = tpu.matmul %16, %17, %cst_13 {dimension_numbers = #tpu.dot_dimension_numbers<[1], [0], [0], [1], [0, 0, 1, 1], [], []>} : vector<128x512xf32>, vector<512x128xf32>, vector<128x128xf32> -> vector<128x128xf32>
    %c0_14 = arith.constant 0 : index
    %c0_15 = arith.constant 0 : index
    %19 = vector.load %arg8[%c0_14, %c0_15] : memref<1x128xf32, #tpu.memory_space<vmem>>, vector<1x128xf32>
    %20 = vector.broadcast %19 : vector<1x128xf32> to vector<128x128xf32>
    %21 = arith.addf %18, %20 : vector<128x128xf32>
    %c0_16 = arith.constant 0 : index
    %c0_17 = arith.constant 0 : index
    %22 = vector.load %arg2[%c0_16, %c0_17] : memref<128x4xf32, #tpu.memory_space<vmem>>, vector<128x4xf32>
    %c0_18 = arith.constant 0 : index
    %c0_19 = arith.constant 0 : index
    %23 = vector.load %arg4[%c0_18, %c0_19] : memref<4x128xf32, #tpu.memory_space<vmem>>, vector<4x128xf32>
    %cst_20 = arith.constant dense<0.000000e+00> : vector<128x128xf32>
    %24 = tpu.matmul %22, %23, %cst_20 {dimension_numbers = #tpu.dot_dimension_numbers<[1], [0], [0], [1], [0, 0, 1, 1], [], []>} : vector<128x4xf32>, vector<4x128xf32>, vector<128x128xf32> -> vector<128x128xf32>
    %25 = arith.mulf %21, %24 : vector<128x128xf32>
    %26 = arith.addf %0, %25 : vector<128x128xf32>
    %c0_21 = arith.constant 0 : index
    %c0_22 = arith.constant 0 : index
    %27 = vector.load %arg9[%c0_21, %c0_22] : memref<128x128xf32, #tpu.memory_space<vmem>>, vector<128x128xf32>
    tpu.vector_store %arg9[%c0_21, %c0_22], %26 {strides = array<i32>} : memref<128x128xf32, #tpu.memory_space<vmem>>, vector<128x128xf32>,
    return
  }
  func.func @transform_0(%arg0: i32) -> (i32, i32) {
    %c0_i32 = arith.constant 0 : i32
    %c0_i32_0 = arith.constant 0 : i32
    return %arg0, %c0_i32 : i32, i32
  }
  func.func @transform_1(%arg0: i32) -> (i32, i32) {
    %c0_i32 = arith.constant 0 : i32
    %c0_i32_0 = arith.constant 0 : i32
    return %arg0, %c0_i32 : i32, i32
  }
  func.func @transform_2(%arg0: i32) -> (i32, i32) {
    %c0_i32 = arith.constant 0 : i32
    %c0_i32_0 = arith.constant 0 : i32
    %c0_i32_1 = arith.constant 0 : i32
    return %c0_i32, %c0_i32_0 : i32, i32
  }
  func.func @transform_3(%arg0: i32) -> (i32, i32) {
    %c0_i32 = arith.constant 0 : i32
    %c0_i32_0 = arith.constant 0 : i32
    %c0_i32_1 = arith.constant 0 : i32
    return %c0_i32, %c0_i32_0 : i32, i32
  }
  func.func @transform_4(%arg0: i32) -> (i32, i32) {
    %c0_i32 = arith.constant 0 : i32
    %c0_i32_0 = arith.constant 0 : i32
    %c0_i32_1 = arith.constant 0 : i32
    return %c0_i32, %c0_i32_0 : i32, i32
  }
  func.func @transform_5(%arg0: i32) -> (i32, i32) {
    %c0_i32 = arith.constant 0 : i32
    %c0_i32_0 = arith.constant 0 : i32
    %c0_i32_1 = arith.constant 0 : i32
    return %c0_i32, %c0_i32_0 : i32, i32
  }
  func.func @transform_6(%arg0: i32) -> (i32, i32) {
    %c0_i32 = arith.constant 0 : i32
    %c0_i32_0 = arith.constant 0 : i32
    %c0_i32_1 = arith.constant 0 : i32
    return %c0_i32, %c0_i32_0 : i32, i32
  }
  func.func @transform_7(%arg0: i32) -> (i32, i32) {
    %c0_i32 = arith.constant 0 : i32
    %c0_i32_0 = arith.constant 0 : i32
    %c0_i32_1 = arith.constant 0 : i32
    return %c0_i32, %c0_i32_0 : i32, i32
  }
  func.func @transform_8(%arg0: i32) -> (i32, i32) {
    %c0_i32 = arith.constant 0 : i32
    %c0_i32_0 = arith.constant 0 : i32
    return %arg0, %c0_i32 : i32, i32
  }
}

</mosaic_0001>

<llo_original>
// kernel: tpu_custom_call.1
$region0: #{tpu_custom_call.1}
  #allocation0 [shape = 'u32[]', space=smem, size = 0x4, offset = 0x4, fixed_abs, tag = 'smem constant byte address 0x4 - core index']
  #allocation1 [shape = 'u32[144,128]{1,0:T(1,128)}', space=vmem, size = 0x12000, scoped, tag = 'internal scratch']
  %s0 = inlined_call_operand.vmem [shape: f32[128,128], index: 0, kind: input, shape index: {}]
  %s1 = inlined_call_operand.vmem [shape: f32[128,4], index: 1, kind: input, shape index: {}]
  %s2 = inlined_call_operand.hbm [shape: f32[128,128], index: 2, kind: input, shape index: {}]
  %s3 = inlined_call_operand.vmem [shape: f32[4,128], index: 3, kind: input, shape index: {}]
  %s4 = inlined_call_operand.hbm [shape: f32[128,512], index: 4, kind: input, shape index: {}]
  %s5 = inlined_call_operand.vmem [shape: f32[1,512], index: 5, kind: input, shape index: {}]
  %s6 = inlined_call_operand.hbm [shape: f32[512,128], index: 6, kind: input, shape index: {}]
  %s7 = inlined_call_operand.vmem [shape: f32[1,128], index: 7, kind: input, shape index: {}]
  %s8 = inlined_call_operand.hbm [shape: f32[128,128], index: 8, kind: output, shape index: {}]
  %s9 = sld [smem:[#allocation0]]
  $region54: #{tpu_custom_call.1} parent=0
    _
  %s11 = ssub.s32 1, %s9
  %s12 = scalar_select 0, %s11, %s9
  $region1: #{tpu_custom_call.1} parent=0
    #allocation2 [shape = 'u8[65536]{0}', space=vmem, size = 0x10000, scoped, tag = 'input window, operand 2, single buffered']
    #allocation3 [shape = 's32[1]{0}', space=sflag, size = 0x4, scoped, tag = 'scoped memory for tpu_custom_call.1']
    #allocation4 [shape = 's32[1]{0}', space=sflag, size = 0x4, scoped, tag = 'scoped memory for tpu_custom_call.1']
    #allocation5 [shape = 'u8[262144]{0}', space=vmem, size = 0x40000, scoped, tag = 'input window, operand 4, single buffered']
    #allocation6 [shape = 's32[1]{0}', space=sflag, size = 0x4, scoped, tag = 'scoped memory for tpu_custom_call.1']
    #allocation7 [shape = 'u8[262144]{0}', space=vmem, size = 0x40000, scoped, tag = 'input window, operand 6, single buffered']
    #allocation8 [shape = 'u8[65536]{0}', space=vmem, size = 0x10000, scoped, tag = 'output window, operand 0, single buffered']
    %13 = vsyncpa [#allocation3], 0
    %14 = vsyncpa [#allocation6], 0
    %15 = vsyncpa [#allocation4], 0
    // Predicated region
    $region2: #{tpu_custom_call.1} parent=1 // pred_check
      _
    $region3: #{tpu_custom_call.1} parent=1 // pred_check_branch
      %17 = sbr.rel (0) target = $region5
    $region4: #{tpu_custom_call.1} parent=1 // pred_region
      _
    $region5: #{tpu_custom_call.1} parent=1 // pred_fallthru
      _
    // Predicated region
    $region6: #{tpu_custom_call.1} parent=1 // pred_check
      _
    $region7: #{tpu_custom_call.1} parent=1 // pred_check_branch
      %19 = sbr.rel (0) target = $region9
    $region8: #{tpu_custom_call.1} parent=1 // pred_region
      _
    $region9: #{tpu_custom_call.1} parent=1 // pred_fallthru
      _
    // Predicated region
    $region10: #{tpu_custom_call.1} parent=1 // pred_check
      _
    $region11: #{tpu_custom_call.1} parent=1 // pred_check_branch
      %21 = sbr.rel (0) target = $region13
    $region12: #{tpu_custom_call.1} parent=1 // pred_region
      %s23 = ssub.s32 2048, 2048
      %24 = vsyncadd [#allocation3], %s23
      %s25 = sshll.u32 [#allocation2], 4
      %s26 = int_to_ptr.vmem [resolvable:$true] %s25
      %31 = dma.hbm_to_vmem [thread:$0]  %s2, 2048, %s26, [#allocation3], 128, 128, 8
    $region13: #{tpu_custom_call.1} parent=1 // pred_fallthru
      _
    // Predicated region
    $region14: #{tpu_custom_call.1} parent=1 // pred_check
      _
    $region15: #{tpu_custom_call.1} parent=1 // pred_check_branch
      %33 = sbr.rel (0) target = $region17
    $region16: #{tpu_custom_call.1} parent=1 // pred_region
      _
    $region17: #{tpu_custom_call.1} parent=1 // pred_fallthru
      _
    // Predicated region
    $region18: #{tpu_custom_call.1} parent=1 // pred_check
      _
    $region19: #{tpu_custom_call.1} parent=1 // pred_check_branch
      %35 = sbr.rel (0) target = $region21
    $region20: #{tpu_custom_call.1} parent=1 // pred_region
      %s37 = ssub.s32 8192, 8192
      %38 = vsyncadd [#allocation6], %s37
      %s39 = sshll.u32 [#allocation5], 4
      %s40 = int_to_ptr.vmem [resolvable:$true] %s39
      %45 = dma.hbm_to_vmem [thread:$0]  %s4, 8192, %s40, [#allocation6], 512, 512, 32
    $region21: #{tpu_custom_call.1} parent=1 // pred_fallthru
      _
    // Predicated region
    $region22: #{tpu_custom_call.1} parent=1 // pred_check
      _
    $region23: #{tpu_custom_call.1} parent=1 // pred_check_branch
      %47 = sbr.rel (0) target = $region25
    $region24: #{tpu_custom_call.1} parent=1 // pred_region
      _
    $region25: #{tpu_custom_call.1} parent=1 // pred_fallthru
      _
    // Predicated region
    $region26: #{tpu_custom_call.1} parent=1 // pred_check
      _
    $region27: #{tpu_custom_call.1} parent=1 // pred_check_branch
      %49 = sbr.rel (0) target = $region29
    $region28: #{tpu_custom_call.1} parent=1 // pred_region
      %s51 = ssub.s32 8192, 8192
      %52 = vsyncadd [#allocation6], %s51
      %s53 = sshll.u32 [#allocation7], 4
      %s54 = int_to_ptr.vmem [resolvable:$true] %s53
      %59 = dma.hbm_to_vmem [thread:$0]  %s6, 8192, %s54, [#allocation6], 128, 128, 8
    $region29: #{tpu_custom_call.1} parent=1 // pred_fallthru
      _
    // Predicated region
    $region30: #{tpu_custom_call.1} parent=1 // pred_check
      _
    $region31: #{tpu_custom_call.1} parent=1 // pred_check_branch
      %61 = sbr.rel (0) target = $region33
    $region32: #{tpu_custom_call.1} parent=1 // pred_region
      _
    $region33: #{tpu_custom_call.1} parent=1 // pred_fallthru
      _
    // Predicated region
    $region34: #{tpu_custom_call.1} parent=1 // pred_check
      _
    $region35: #{tpu_custom_call.1} parent=1 // pred_check_branch
      %63 = sbr.rel (0) target = $region37
    $region36: #{tpu_custom_call.1} parent=1 // pred_region
      %64 = dma.done [#allocation3], 2048
    $region37: #{tpu_custom_call.1} parent=1 // pred_fallthru
      _
    // Predicated region
    $region38: #{tpu_custom_call.1} parent=1 // pred_check
      _
    $region39: #{tpu_custom_call.1} parent=1 // pred_check_branch
      %66 = sbr.rel (0) target = $region41
    $region40: #{tpu_custom_call.1} parent=1 // pred_region
      %67 = dma.done [#allocation6], 8192
    $region41: #{tpu_custom_call.1} parent=1 // pred_fallthru
      _
    // Predicated region
    $region42: #{tpu_custom_call.1} parent=1 // pred_check
      _
    $region43: #{tpu_custom_call.1} parent=1 // pred_check_branch
      %69 = sbr.rel (0) target = $region45
    $region44: #{tpu_custom_call.1} parent=1 // pred_region
      %70 = dma.done [#allocation6], 8192
    $region45: #{tpu_custom_call.1} parent=1 // pred_fallthru
      _
    %v71 = vld [vmem:[%s0] sm:$0xff]
    %v72 = vld [vmem:[%s0 + $0x8] sm:$0xff]
    %v73 = vld [vmem:[%s0 + $0x10] sm:$0xff]
    %v74 = vld [vmem:[%s0 + $0x18] sm:$0xff]
    %v75 = vld [vmem:[%s0 + $0x20] sm:$0xff]
    %v76 = vld [vmem:[%s0 + $0x28] sm:$0xff]
    %v77 = vld [vmem:[%s0 + $0x30] sm:$0xff]
    %v78 = vld [vmem:[%s0 + $0x38] sm:$0xff]
    %v79 = vld [vmem:[%s0 + $0x40] sm:$0xff]
    %v80 = vld [vmem:[%s0 + $0x48] sm:$0xff]
    %v81 = vld [vmem:[%s0 + $0x50] sm:$0xff]
    %v82 = vld [vmem:[%s0 + $0x58] sm:$0xff]
    %v83 = vld [vmem:[%s0 + $0x60] sm:$0xff]
    %v84 = vld [vmem:[%s0 + $0x68] sm:$0xff]
    %v85 = vld [vmem:[%s0 + $0x70] sm:$0xff]
    %v86 = vld [vmem:[%s0 + $0x78] sm:$0xff]
    %v87 = vld [vmem:[#allocation2] sm:$0xff]
    %v88 = vld [vmem:[#allocation2 + $0x8] sm:$0xff]
    %v89 = vld [vmem:[#allocation2 + $0x10] sm:$0xff]
    %v90 = vld [vmem:[#allocation2 + $0x18] sm:$0xff]
    %v91 = vld [vmem:[#allocation2 + $0x20] sm:$0xff]
    %v92 = vld [vmem:[#allocation2 + $0x28] sm:$0xff]
    %v93 = vld [vmem:[#allocation2 + $0x30] sm:$0xff]
    %v94 = vld [vmem:[#allocation2 + $0x38] sm:$0xff]
    %v95 = vld [vmem:[#allocation2 + $0x40] sm:$0xff]
    %v96 = vld [vmem:[#allocation2 + $0x48] sm:$0xff]
    %v97 = vld [vmem:[#allocation2 + $0x50] sm:$0xff]
    %v98 = vld [vmem:[#allocation2 + $0x58] sm:$0xff]
    %v99 = vld [vmem:[#allocation2 + $0x60] sm:$0xff]
    %v100 = vld [vmem:[#allocation2 + $0x68] sm:$0xff]
    %v101 = vld [vmem:[#allocation2 + $0x70] sm:$0xff]
    %v102 = vld [vmem:[#allocation2 + $0x78] sm:$0xff]
    %103 = vmatprep.subr.mxu0 0.0
    %104 = vmatpush1.msra.mxu0 %v87
    %105 = vmatprep.subr.mxu0 0.0
    %106 = vmatpush1.msra.mxu0 %v88
    %107 = vmatprep.subr.mxu0 0.0
    %108 = vmatpush1.msra.mxu0 %v89
    %109 = vmatprep.subr.mxu0 0.0
    %110 = vmatpush1.msra.mxu0 %v90
    %111 = vmatprep.subr.mxu0 0.0
    %112 = vmatpush1.msra.mxu0 %v91
    %113 = vmatprep.subr.mxu0 0.0
    %114 = vmatpush1.msra.mxu0 %v92
    %115 = vmatprep.subr.mxu0 0.0
    %116 = vmatpush1.msra.mxu0 %v93
    %117 = vmatprep.subr.mxu0 0.0
    %118 = vmatpush1.msra.mxu0 %v94
    %119 = vmatprep.subr.mxu0 0.0
    %120 = vmatpush1.msra.mxu0 %v95
    %121 = vmatprep.subr.mxu0 0.0
    %122 = vmatpush1.msra.mxu0 %v96
    %123 = vmatprep.subr.mxu0 0.0
    %124 = vmatpush1.msra.mxu0 %v97
    %125 = vmatprep.subr.mxu0 0.0
    %126 = vmatpush1.msra.mxu0 %v98
    %127 = vmatprep.subr.mxu0 0.0
    %128 = vmatpush1.msra.mxu0 %v99
    %129 = vmatprep.subr.mxu0 0.0
    %130 = vmatpush1.msra.mxu0 %v100
    %131 = vmatprep.subr.mxu0 0.0
    %132 = vmatpush1.msra.mxu0 %v101
    %133 = vmatprep.subr.mxu0 0.0
    %134 = vmatpush1.msra.mxu0 %v102
    %135 = vmatprep.subr.mxu0 0.0
    %136 = vmatpush1.msra.mxu0 0.0
    %137 = vmatprep.subr.mxu0 0.0
    %138 = vmatpush1.msra.mxu0 0.0
    %139 = vmatprep.subr.mxu0 0.0
    %140 = vmatpush1.msra.mxu0 0.0
    %141 = vmatprep.subr.mxu0 0.0
    %142 = vmatpush1.msra.mxu0 0.0
    %143 = vmatprep.subr.mxu0 0.0
    %144 = vmatpush1.msra.mxu0 0.0
    %145 = vmatprep.subr.mxu0 0.0
    %146 = vmatpush1.msra.mxu0 0.0
    %147 = vmatprep.subr.mxu0 0.0
    %148 = vmatpush1.msra.mxu0 0.0
    %149 = vmatprep.subr.mxu0 0.0
    %150 = vmatpush1.msra.mxu0 0.0
    %151 = vmatprep.subr.mxu0 0.0
    %152 = vmatpush1.msra.mxu0 0.0
    %153 = vmatprep.subr.mxu0 0.0
    %154 = vmatpush1.msra.mxu0 0.0
    %155 = vmatprep.subr.mxu0 0.0
    %156 = vmatpush1.msra.mxu0 0.0
    %157 = vmatprep.subr.mxu0 0.0
    %158 = vmatpush1.msra.mxu0 0.0
    %159 = vmatprep.subr.mxu0 0.0
    %160 = vmatpush1.msra.mxu0 0.0
    %161 = vmatprep.subr.mxu0 0.0
    %162 = vmatpush1.msra.mxu0 0.0
    %163 = vmatprep.subr.mxu0 0.0
    %164 = vmatpush1.msra.mxu0 0.0
    %165 = vmatprep.subr.mxu0 0.0
    %166 = vmatpush1.msra.mxu0 0.0
    %167 = vmatprep.mubr.f32.mxu0 0.0
    %168 = vmatmul.mubr.f32.gmra.mrb[0].mxu0 %v71
    %v169 = vpop.f32.mrb[0].mxu0
    %v170 = vadd.f32 0.0, %v169
    %v171 = vpop.f32.mrb[0].mxu0
    %172 = vmatprep.mubr.f32.mxu0 0.0
    %173 = vmatmul.mubr.f32.gmra.mrb[0].mxu0 %v72
    %v174 = vpop.f32.mrb[0].mxu0
    %v175 = vadd.f32 0.0, %v174
    %v176 = vpop.f32.mrb[0].mxu0
    %177 = vmatprep.mubr.f32.mxu0 0.0
    %178 = vmatmul.mubr.f32.gmra.mrb[0].mxu0 %v73
    %v179 = vpop.f32.mrb[0].mxu0
    %v180 = vadd.f32 0.0, %v179
    %v181 = vpop.f32.mrb[0].mxu0
    %182 = vmatprep.mubr.f32.mxu0 0.0
    %183 = vmatmul.mubr.f32.gmra.mrb[0].mxu0 %v74
    %v184 = vpop.f32.mrb[0].mxu0
    %v185 = vadd.f32 0.0, %v184
    %v186 = vpop.f32.mrb[0].mxu0
    %187 = vmatprep.mubr.f32.mxu0 0.0
    %188 = vmatmul.mubr.f32.gmra.mrb[0].mxu0 %v75
    %v189 = vpop.f32.mrb[0].mxu0
    %v190 = vadd.f32 0.0, %v189
    %v191 = vpop.f32.mrb[0].mxu0
    %192 = vmatprep.mubr.f32.mxu0 0.0
    %193 = vmatmul.mubr.f32.gmra.mrb[0].mxu0 %v76
    %v194 = vpop.f32.mrb[0].mxu0
    %v195 = vadd.f32 0.0, %v194
    %v196 = vpop.f32.mrb[0].mxu0
    %197 = vmatprep.mubr.f32.mxu0 0.0
    %198 = vmatmul.mubr.f32.gmra.mrb[0].mxu0 %v77
    %v199 = vpop.f32.mrb[0].mxu0
    %v200 = vadd.f32 0.0, %v199
    %v201 = vpop.f32.mrb[0].mxu0
    %202 = vmatprep.mubr.f32.mxu0 0.0
    %203 = vmatmul.mubr.f32.gmra.mrb[0].mxu0 %v78
    %v204 = vpop.f32.mrb[0].mxu0
    %v205 = vadd.f32 0.0, %v204
    %v206 = vpop.f32.mrb[0].mxu0
    %207 = vmatprep.mubr.f32.mxu0 0.0
    %208 = vmatmul.mubr.f32.gmra.mrb[0].mxu0 %v79
    %v209 = vpop.f32.mrb[0].mxu0
    %v210 = vadd.f32 0.0, %v209
    %v211 = vpop.f32.mrb[0].mxu0
    %212 = vmatprep.mubr.f32.mxu0 0.0
    %213 = vmatmul.mubr.f32.gmra.mrb[0].mxu0 %v80
    %v214 = vpop.f32.mrb[0].mxu0
    %v215 = vadd.f32 0.0, %v214
    %v216 = vpop.f32.mrb[0].mxu0
    %217 = vmatprep.mubr.f32.mxu0 0.0
    %218 = vmatmul.mubr.f32.gmra.mrb[0].mxu0 %v81
    %v219 = vpop.f32.mrb[0].mxu0
    %v220 = vadd.f32 0.0, %v219
    %v221 = vpop.f32.mrb[0].mxu0
    %222 = vmatprep.mubr.f32.mxu0 0.0
    %223 = vmatmul.mubr.f32.gmra.mrb[0].mxu0 %v82
    %v224 = vpop.f32.mrb[0].mxu0
    %v225 = vadd.f32 0.0, %v224
    %v226 = vpop.f32.mrb[0].mxu0
    %227 = vmatprep.mubr.f32.mxu0 0.0
    %228 = vmatmul.mubr.f32.gmra.mrb[0].mxu0 %v83
    %v229 = vpop.f32.mrb[0].mxu0
    %v230 = vadd.f32 0.0, %v229
    %v231 = vpop.f32.mrb[0].mxu0
    %232 = vmatprep.mubr.f32.mxu0 0.0
    %233 = vmatmul.mubr.f32.gmra.mrb[0].mxu0 %v84
    %v234 = vpop.f32.mrb[0].mxu0
    %v235 = vadd.f32 0.0, %v234
    %v236 = vpop.f32.mrb[0].mxu0
    %237 = vmatprep.mubr.f32.mxu0 0.0
    %238 = vmatmul.mubr.f32.gmra.mrb[0].mxu0 %v85
    %v239 = vpop.f32.mrb[0].mxu0
    %v240 = vadd.f32 0.0, %v239
    %v241 = vpop.f32.mrb[0].mxu0
    %242 = vmatprep.mubr.f32.mxu0 0.0
    %243 = vmatmul.mubr.f32.gmra.mrb[0].mxu0 %v86
    %v244 = vpop.f32.mrb[0].mxu0
    %v245 = vadd.f32 0.0, %v244
    %v246 = vpop.f32.mrb[0].mxu0
    %247 = vdwg.mxu0
    %v248 = vsub.f32 %v71, %v170
    %v249 = vsub.f32 %v72, %v175
    %v250 = vsub.f32 %v73, %v180
    %v251 = vsub.f32 %v74, %v185
    %v252 = vsub.f32 %v75, %v190
    %v253 = vsub.f32 %v76, %v195
    %v254 = vsub.f32 %v77, %v200
    %v255 = vsub.f32 %v78, %v205
    %v256 = vsub.f32 %v79, %v210
    %v257 = vsub.f32 %v80, %v215
    %v258 = vsub.f32 %v81, %v220
    %v259 = vsub.f32 %v82, %v225
    %v260 = vsub.f32 %v83, %v230
    %v261 = vsub.f32 %v84, %v235
    %v262 = vsub.f32 %v85, %v240
    %v263 = vsub.f32 %v86, %v245
    %v264 = vmul.f32 %v248, %v248
    %v265 = vmul.f32 %v249, %v249
    %v266 = vmul.f32 %v250, %v250
    %v267 = vmul.f32 %v251, %v251
    %v268 = vmul.f32 %v252, %v252
    %v269 = vmul.f32 %v253, %v253
    %v270 = vmul.f32 %v254, %v254
    %v271 = vmul.f32 %v255, %v255
    %v272 = vmul.f32 %v256, %v256
    %v273 = vmul.f32 %v257, %v257
    %v274 = vmul.f32 %v258, %v258
    %v275 = vmul.f32 %v259, %v259
    %v276 = vmul.f32 %v260, %v260
    %v277 = vmul.f32 %v261, %v261
    %v278 = vmul.f32 %v262, %v262
    %v279 = vmul.f32 %v263, %v263
    %280 = vmatprep.subr.mxu0 0.0
    %281 = vmatpush1.msra.mxu0 %v87
    %282 = vmatprep.subr.mxu0 0.0
    %283 = vmatpush1.msra.mxu0 %v88
    %284 = vmatprep.subr.mxu0 0.0
    %285 = vmatpush1.msra.mxu0 %v89
    %286 = vmatprep.subr.mxu0 0.0
    %287 = vmatpush1.msra.mxu0 %v90
    %288 = vmatprep.subr.mxu0 0.0
    %289 = vmatpush1.msra.mxu0 %v91
    %290 = vmatprep.subr.mxu0 0.0
    %291 = vmatpush1.msra.mxu0 %v92
    %292 = vmatprep.subr.mxu0 0.0
    %293 = vmatpush1.msra.mxu0 %v93
    %294 = vmatprep.subr.mxu0 0.0
    %295 = vmatpush1.msra.mxu0 %v94
    %296 = vmatprep.subr.mxu0 0.0
    %297 = vmatpush1.msra.mxu0 %v95
    %298 = vmatprep.subr.mxu0 0.0
    %299 = vmatpush1.msra.mxu0 %v96
    %300 = vmatprep.subr.mxu0 0.0
    %301 = vmatpush1.msra.mxu0 %v97
    %302 = vmatprep.subr.mxu0 0.0
    %303 = vmatpush1.msra.mxu0 %v98
    %304 = vmatprep.subr.mxu0 0.0
    %305 = vmatpush1.msra.mxu0 %v99
    %306 = vmatprep.subr.mxu0 0.0
    %307 = vmatpush1.msra.mxu0 %v100
    %308 = vmatprep.subr.mxu0 0.0
    %309 = vmatpush1.msra.mxu0 %v101
    %310 = vmatprep.subr.mxu0 0.0
    %311 = vmatpush1.msra.mxu0 %v102
    %312 = vmatprep.subr.mxu0 0.0
    %313 = vmatpush1.msra.mxu0 0.0
    %314 = vmatprep.subr.mxu0 0.0
    %315 = vmatpush1.msra.mxu0 0.0
    %316 = vmatprep.subr.mxu0 0.0
    %317 = vmatpush1.msra.mxu0 0.0
    %318 = vmatprep.subr.mxu0 0.0
    %319 = vmatpush1.msra.mxu0 0.0
    %320 = vmatprep.subr.mxu0 0.0
    %321 = vmatpush1.msra.mxu0 0.0
    %322 = vmatprep.subr.mxu0 0.0
    %323 = vmatpush1.msra.mxu0 0.0
    %324 = vmatprep.subr.mxu0 0.0
    %325 = vmatpush1.msra.mxu0 0.0
    %326 = vmatprep.subr.mxu0 0.0
    %327 = vmatpush1.msra.mxu0 0.0
    %328 = vmatprep.subr.mxu0 0.0
    %329 = vmatpush1.msra.mxu0 0.0
    %330 = vmatprep.subr.mxu0 0.0
    %331 = vmatpush1.msra.mxu0 0.0
    %332 = vmatprep.subr.mxu0 0.0
    %333 = vmatpush1.msra.mxu0 0.0
    %334 = vmatprep.subr.mxu0 0.0
    %335 = vmatpush1.msra.mxu0 0.0
    %336 = vmatprep.subr.mxu0 0.0
    %337 = vmatpush1.msra.mxu0 0.0
    %338 = vmatprep.subr.mxu0 0.0
    %339 = vmatpush1.msra.mxu0 0.0
    %340 = vmatprep.subr.mxu0 0.0
    %341 = vmatpush1.msra.mxu0 0.0
    %342 = vmatprep.subr.mxu0 0.0
    %343 = vmatpush1.msra.mxu0 0.0
    %344 = vmatprep.mubr.f32.mxu0 0.0
    %345 = vmatmul.mubr.f32.gmra.mrb[0].mxu0 %v264
    %v346 = vpop.f32.mrb[0].mxu0
    %v347 = vadd.f32 1e-05, %v346
    %v348 = vpop.f32.mrb[0].mxu0
    %349 = vmatprep.mubr.f32.mxu0 0.0
    %350 = vmatmul.mubr.f32.gmra.mrb[0].mxu0 %v265
    %v351 = vpop.f32.mrb[0].mxu0
    %v352 = vadd.f32 1e-05, %v351
    %v353 = vpop.f32.mrb[0].mxu0
    %354 = vmatprep.mubr.f32.mxu0 0.0
    %355 = vmatmul.mubr.f32.gmra.mrb[0].mxu0 %v266
    %v356 = vpop.f32.mrb[0].mxu0
    %v357 = vadd.f32 1e-05, %v356
    %v358 = vpop.f32.mrb[0].mxu0
    %359 = vmatprep.mubr.f32.mxu0 0.0
    %360 = vmatmul.mubr.f32.gmra.mrb[0].mxu0 %v267
    %v361 = vpop.f32.mrb[0].mxu0
    %v362 = vadd.f32 1e-05, %v361
    %v363 = vpop.f32.mrb[0].mxu0
    %364 = vmatprep.mubr.f32.mxu0 0.0
    %365 = vmatmul.mubr.f32.gmra.mrb[0].mxu0 %v268
    %v366 = vpop.f32.mrb[0].mxu0
    %v367 = vadd.f32 1e-05, %v366
    %v368 = vpop.f32.mrb[0].mxu0
    %369 = vmatprep.mubr.f32.mxu0 0.0
    %370 = vmatmul.mubr.f32.gmra.mrb[0].mxu0 %v269
    %v371 = vpop.f32.mrb[0].mxu0
    %v372 = vadd.f32 1e-05, %v371
    %v373 = vpop.f32.mrb[0].mxu0
    %374 = vmatprep.mubr.f32.mxu0 0.0
    %375 = vmatmul.mubr.f32.gmra.mrb[0].mxu0 %v270
    %v376 = vpop.f32.mrb[0].mxu0
    %v377 = vadd.f32 1e-05, %v376
    %v378 = vpop.f32.mrb[0].mxu0
    %379 = vmatprep.mubr.f32.mxu0 0.0
    %380 = vmatmul.mubr.f32.gmra.mrb[0].mxu0 %v271
    %v381 = vpop.f32.mrb[0].mxu0
    %v382 = vadd.f32 1e-05, %v381
    %v383 = vpop.f32.mrb[0].mxu0
    %384 = vmatprep.mubr.f32.mxu0 0.0
    %385 = vmatmul.mubr.f32.gmra.mrb[0].mxu0 %v272
    %v386 = vpop.f32.mrb[0].mxu0
    %v387 = vadd.f32 1e-05, %v386
    %v388 = vpop.f32.mrb[0].mxu0
    %389 = vmatprep.mubr.f32.mxu0 0.0
    %390 = vmatmul.mubr.f32.gmra.mrb[0].mxu0 %v273
    %v391 = vpop.f32.mrb[0].mxu0
    %v392 = vadd.f32 1e-05, %v391
    %v393 = vpop.f32.mrb[0].mxu0
    %394 = vmatprep.mubr.f32.mxu0 0.0
    %395 = vmatmul.mubr.f32.gmra.mrb[0].mxu0 %v274
    %v396 = vpop.f32.mrb[0].mxu0
    %v397 = vadd.f32 1e-05, %v396
    %v398 = vpop.f32.mrb[0].mxu0
    %399 = vmatprep.mubr.f32.mxu0 0.0
    %400 = vmatmul.mubr.f32.gmra.mrb[0].mxu0 %v275
    %v401 = vpop.f32.mrb[0].mxu0
    %v402 = vadd.f32 1e-05, %v401
    %v403 = vpop.f32.mrb[0].mxu0
    %404 = vmatprep.mubr.f32.mxu0 0.0
    %405 = vmatmul.mubr.f32.gmra.mrb[0].mxu0 %v276
    %v406 = vpop.f32.mrb[0].mxu0
    %v407 = vadd.f32 1e-05, %v406
    %v408 = vpop.f32.mrb[0].mxu0
    %409 = vmatprep.mubr.f32.mxu0 0.0
    %410 = vmatmul.mubr.f32.gmra.mrb[0].mxu0 %v277
    %v411 = vpop.f32.mrb[0].mxu0
    %v412 = vadd.f32 1e-05, %v411
    %v413 = vpop.f32.mrb[0].mxu0
    %414 = vmatprep.mubr.f32.mxu0 0.0
    %415 = vmatmul.mubr.f32.gmra.mrb[0].mxu0 %v278
    %v416 = vpop.f32.mrb[0].mxu0
    %v417 = vadd.f32 1e-05, %v416
    %v418 = vpop.f32.mrb[0].mxu0
    %419 = vmatprep.mubr.f32.mxu0 0.0
    %420 = vmatmul.mubr.f32.gmra.mrb[0].mxu0 %v279
    %v421 = vpop.f32.mrb[0].mxu0
    %v422 = vadd.f32 1e-05, %v421
    %v423 = vpop.f32.mrb[0].mxu0
    %424 = vdwg.mxu0
    %v425 = vrsqrt.pop %v347
    %v426 = vrsqrt.pop %v352
    %v427 = vrsqrt.pop %v357
    %v428 = vrsqrt.pop %v362
    %v429 = vrsqrt.pop %v367
    %v430 = vrsqrt.pop %v372
    %v431 = vrsqrt.pop %v377
    %v432 = vrsqrt.pop %v382
    %v433 = vrsqrt.pop %v387
    %v434 = vrsqrt.pop %v392
    %v435 = vrsqrt.pop %v397
    %v436 = vrsqrt.pop %v402
    %v437 = vrsqrt.pop %v407
    %v438 = vrsqrt.pop %v412
    %v439 = vrsqrt.pop %v417
    %v440 = vrsqrt.pop %v422
    %v441 = vmul.f32 %v248, %v425
    %v442 = vmul.f32 %v249, %v426
    %v443 = vmul.f32 %v250, %v427
    %v444 = vmul.f32 %v251, %v428
    %v445 = vmul.f32 %v252, %v429
    %v446 = vmul.f32 %v253, %v430
    %v447 = vmul.f32 %v254, %v431
    %v448 = vmul.f32 %v255, %v432
    %v449 = vmul.f32 %v256, %v433
    %v450 = vmul.f32 %v257, %v434
    %v451 = vmul.f32 %v258, %v435
    %v452 = vmul.f32 %v259, %v436
    %v453 = vmul.f32 %v260, %v437
    %v454 = vmul.f32 %v261, %v438
    %v455 = vmul.f32 %v262, %v439
    %v456 = vmul.f32 %v263, %v440
    %v457 = vld [vmem:[#allocation5] sm:$0xff]
    %v458 = vld [vmem:[#allocation5 + $0x8] sm:$0xff]
    %v459 = vld [vmem:[#allocation5 + $0x10] sm:$0xff]
    %v460 = vld [vmem:[#allocation5 + $0x18] sm:$0xff]
    %v461 = vld [vmem:[#allocation5 + $0x20] sm:$0xff]
    %v462 = vld [vmem:[#allocation5 + $0x28] sm:$0xff]
    %v463 = vld [vmem:[#allocation5 + $0x30] sm:$0xff]
    %v464 = vld [vmem:[#allocation5 + $0x38] sm:$0xff]
    %v465 = vld [vmem:[#allocation5 + $0x40] sm:$0xff]
    %v466 = vld [vmem:[#allocation5 + $0x48] sm:$0xff]
    %v467 = vld [vmem:[#allocation5 + $0x50] sm:$0xff]
    %v468 = vld [vmem:[#allocation5 + $0x58] sm:$0xff]
    %v469 = vld [vmem:[#allocation5 + $0x60] sm:$0xff]
    %v470 = vld [vmem:[#allocation5 + $0x68] sm:$0xff]
    %v471 = vld [vmem:[#allocation5 + $0x70] sm:$0xff]
    %v472 = vld [vmem:[#allocation5 + $0x78] sm:$0xff]
    %v473 = vld [vmem:[#allocation5 + $0x80] sm:$0xff]
    %v474 = vld [vmem:[#allocation5 + $0x88] sm:$0xff]
    %v475 = vld [vmem:[#allocation5 + $0x90] sm:$0xff]
    %v476 = vld [vmem:[#allocation5 + $0x98] sm:$0xff]
    %v477 = vld [vmem:[#allocation5 + $0xa0] sm:$0xff]
    %v478 = vld [vmem:[#allocation5 + $0xa8] sm:$0xff]
    %v479 = vld [vmem:[#allocation5 + $0xb0] sm:$0xff]
    %v480 = vld [vmem:[#allocation5 + $0xb8] sm:$0xff]
    %v481 = vld [vmem:[#allocation5 + $0xc0] sm:$0xff]
    %v482 = vld [vmem:[#allocation5 + $0xc8] sm:$0xff]
    %v483 = vld [vmem:[#allocation5 + $0xd0] sm:$0xff]
    %v484 = vld [vmem:[#allocation5 + $0xd8] sm:$0xff]
    %v485 = vld [vmem:[#allocation5 + $0xe0] sm:$0xff]
    %v486 = vld [vmem:[#allocation5 + $0xe8] sm:$0xff]
    %v487 = vld [vmem:[#allocation5 + $0xf0] sm:$0xff]
    %v488 = vld [vmem:[#allocation5 + $0xf8] sm:$0xff]
    %v489 = vld [vmem:[#allocation5 + $0x100] sm:$0xff]
    %v490 = vld [vmem:[#allocation5 + $0x108] sm:$0xff]
    %v491 = vld [vmem:[#allocation5 + $0x110] sm:$0xff]
    %v492 = vld [vmem:[#allocation5 + $0x118] sm:$0xff]
    %v493 = vld [vmem:[#allocation5 + $0x120] sm:$0xff]
    %v494 = vld [vmem:[#allocation5 + $0x128] sm:$0xff]
    %v495 = vld [vmem:[#allocation5 + $0x130] sm:$0xff]
    %v496 = vld [vmem:[#allocation5 + $0x138] sm:$0xff]
    %v497 = vld [vmem:[#allocation5 + $0x140] sm:$0xff]
    %v498 = vld [vmem:[#allocation5 + $0x148] sm:$0xff]
    %v499 = vld [vmem:[#allocation5 + $0x150] sm:$0xff]
    %v500 = vld [vmem:[#allocation5 + $0x158] sm:$0xff]
    %v501 = vld [vmem:[#allocation5 + $0x160] sm:$0xff]
    %v502 = vld [vmem:[#allocation5 + $0x168] sm:$0xff]
    %v503 = vld [vmem:[#allocation5 + $0x170] sm:$0xff]
    %v504 = vld [vmem:[#allocation5 + $0x178] sm:$0xff]
    %v505 = vld [vmem:[#allocation5 + $0x180] sm:$0xff]
    %v506 = vld [vmem:[#allocation5 + $0x188] sm:$0xff]
    %v507 = vld [vmem:[#allocation5 + $0x190] sm:$0xff]
    %v508 = vld [vmem:[#allocation5 + $0x198] sm:$0xff]
    %v509 = vld [vmem:[#allocation5 + $0x1a0] sm:$0xff]
    %v510 = vld [vmem:[#allocation5 + $0x1a8] sm:$0xff]
    %v511 = vld [vmem:[#allocation5 + $0x1b0] sm:$0xff]
    %v512 = vld [vmem:[#allocation5 + $0x1b8] sm:$0xff]
    %v513 = vld [vmem:[#allocation5 + $0x1c0] sm:$0xff]
    %v514 = vld [vmem:[#allocation5 + $0x1c8] sm:$0xff]
    %v515 = vld [vmem:[#allocation5 + $0x1d0] sm:$0xff]
    %v516 = vld [vmem:[#allocation5 + $0x1d8] sm:$0xff]
    %v517 = vld [vmem:[#allocation5 + $0x1e0] sm:$0xff]
    %v518 = vld [vmem:[#allocation5 + $0x1e8] sm:$0xff]
    %v519 = vld [vmem:[#allocation5 + $0x1f0] sm:$0xff]
    %v520 = vld [vmem:[#allocation5 + $0x1f8] sm:$0xff]
    %v521 = vld [vmem:[%s5] sm:$0xf]
    %v523 = vlaneseq
    %v524 = vshrl.u32 %v523, 7
    %v525 = vsub.s32 0, %v524
    %v526 = vrot.slane %v521, %v525
    %v527 = vlaneseq
    %v528 = vshrl.u32 %v527, 7
    %v529 = vsub.s32 1, %v528
    %v530 = vrot.slane %v521, %v529
    %v531 = vlaneseq
    %v532 = vshrl.u32 %v531, 7
    %v533 = vsub.s32 2, %v532
    %v534 = vrot.slane %v521, %v533
    %v535 = vlaneseq
    %v536 = vshrl.u32 %v535, 7
    %v537 = vsub.s32 3, %v536
    %v538 = vrot.slane %v521, %v537
    %543 = vmatprep.subr.mxu0 %v458
    %544 = vmatpush1.msra.mxu0 %v457
    %545 = vmatprep.subr.mxu0 %v462
    %546 = vmatpush1.msra.mxu0 %v461
    %547 = vmatprep.subr.mxu0 %v466
    %548 = vmatpush1.msra.mxu0 %v465
    %549 = vmatprep.subr.mxu0 %v470
    %550 = vmatpush1.msra.mxu0 %v469
    %551 = vmatprep.subr.mxu0 %v474
    %552 = vmatpush1.msra.mxu0 %v473
    %553 = vmatprep.subr.mxu0 %v478
    %554 = vmatpush1.msra.mxu0 %v477
    %555 = vmatprep.subr.mxu0 %v482
    %556 = vmatpush1.msra.mxu0 %v481
    %557 = vmatprep.subr.mxu0 %v486
    %558 = vmatpush1.msra.mxu0 %v485
    %559 = vmatprep.subr.mxu0 %v490
    %560 = vmatpush1.msra.mxu0 %v489
    %561 = vmatprep.subr.mxu0 %v494
    %562 = vmatpush1.msra.mxu0 %v493
    %563 = vmatprep.subr.mxu0 %v498
    %564 = vmatpush1.msra.mxu0 %v497
    %565 = vmatprep.subr.mxu0 %v502
    %566 = vmatpush1.msra.mxu0 %v501
    %567 = vmatprep.subr.mxu0 %v506
    %568 = vmatpush1.msra.mxu0 %v505
    %569 = vmatprep.subr.mxu0 %v510
    %570 = vmatpush1.msra.mxu0 %v509
    %571 = vmatprep.subr.mxu0 %v514
    %572 = vmatpush1.msra.mxu0 %v513
    %573 = vmatprep.subr.mxu0 %v518
    %574 = vmatpush1.msra.mxu0 %v517
    %575 = vmatprep.subr.mxu0 0.0
    %576 = vmatpush1.msra.mxu0 0.0
    %577 = vmatprep.subr.mxu0 0.0
    %578 = vmatpush1.msra.mxu0 0.0
    %579 = vmatprep.subr.mxu0 0.0
    %580 = vmatpush1.msra.mxu0 0.0
    %581 = vmatprep.subr.mxu0 0.0
    %582 = vmatpush1.msra.mxu0 0.0
    %583 = vmatprep.subr.mxu0 0.0
    %584 = vmatpush1.msra.mxu0 0.0
    %585 = vmatprep.subr.mxu0 0.0
    %586 = vmatpush1.msra.mxu0 0.0
    %587 = vmatprep.subr.mxu0 0.0
    %588 = vmatpush1.msra.mxu0 0.0
    %589 = vmatprep.subr.mxu0 0.0
    %590 = vmatpush1.msra.mxu0 0.0
    %591 = vmatprep.subr.mxu0 0.0
    %592 = vmatpush1.msra.mxu0 0.0
    %593 = vmatprep.subr.mxu0 0.0
    %594 = vmatpush1.msra.mxu0 0.0
    %595 = vmatprep.subr.mxu0 0.0
    %596 = vmatpush1.msra.mxu0 0.0
    %597 = vmatprep.subr.mxu0 0.0
    %598 = vmatpush1.msra.mxu0 0.0
    %599 = vmatprep.subr.mxu0 0.0
    %600 = vmatpush1.msra.mxu0 0.0
    %601 = vmatprep.subr.mxu0 0.0
    %602 = vmatpush1.msra.mxu0 0.0
    %603 = vmatprep.subr.mxu0 0.0
    %604 = vmatpush1.msra.mxu0 0.0
    %605 = vmatprep.subr.mxu0 0.0
    %606 = vmatpush1.msra.mxu0 0.0
    %607 = vmatprep.mubr.f32.mxu0 0.0
    %608 = vmatmul.mubr.f32.gmra.mrb[0].mxu0 %v441
    %v609 = vpop.f32.mrb[0].mxu0
    %v610 = vadd.f32 %v526, %v609
    %v611 = vpop.f32.mrb[0].mxu0
    %v612 = vadd.f32 %v530, %v611
    %613 = vmatprep.mubr.f32.mxu0 0.0
    %614 = vmatmul.mubr.f32.gmra.mrb[0].mxu0 %v442
    %v615 = vpop.f32.mrb[0].mxu0
    %v616 = vadd.f32 %v526, %v615
    %v617 = vpop.f32.mrb[0].mxu0
    %v618 = vadd.f32 %v530, %v617
    %619 = vmatprep.mubr.f32.mxu0 0.0
    %620 = vmatmul.mubr.f32.gmra.mrb[0].mxu0 %v443
    %v621 = vpop.f32.mrb[0].mxu0
    %v622 = vadd.f32 %v526, %v621
    %v623 = vpop.f32.mrb[0].mxu0
    %v624 = vadd.f32 %v530, %v623
    %625 = vmatprep.mubr.f32.mxu0 0.0
    %626 = vmatmul.mubr.f32.gmra.mrb[0].mxu0 %v444
    %v627 = vpop.f32.mrb[0].mxu0
    %v628 = vadd.f32 %v526, %v627
    %v629 = vpop.f32.mrb[0].mxu0
    %v630 = vadd.f32 %v530, %v629
    %631 = vmatprep.mubr.f32.mxu0 0.0
    %632 = vmatmul.mubr.f32.gmra.mrb[0].mxu0 %v445
    %v633 = vpop.f32.mrb[0].mxu0
    %v634 = vadd.f32 %v526, %v633
    %v635 = vpop.f32.mrb[0].mxu0
    %v636 = vadd.f32 %v530, %v635
    %637 = vmatprep.mubr.f32.mxu0 0.0
    %638 = vmatmul.mubr.f32.gmra.mrb[0].mxu0 %v446
    %v639 = vpop.f32.mrb[0].mxu0
    %v640 = vadd.f32 %v526, %v639
    %v641 = vpop.f32.mrb[0].mxu0
    %v642 = vadd.f32 %v530, %v641
    %643 = vmatprep.mubr.f32.mxu0 0.0
    %644 = vmatmul.mubr.f32.gmra.mrb[0].mxu0 %v447
    %v645 = vpop.f32.mrb[0].mxu0
    %v646 = vadd.f32 %v526, %v645
    %v647 = vpop.f32.mrb[0].mxu0
    %v648 = vadd.f32 %v530, %v647
    %649 = vmatprep.mubr.f32.mxu0 0.0
    %650 = vmatmul.mubr.f32.gmra.mrb[0].mxu0 %v448
    %v651 = vpop.f32.mrb[0].mxu0
    %v652 = vadd.f32 %v526, %v651
    %v653 = vpop.f32.mrb[0].mxu0
    %v654 = vadd.f32 %v530, %v653
    %655 = vmatprep.mubr.f32.mxu0 0.0
    %656 = vmatmul.mubr.f32.gmra.mrb[0].mxu0 %v449
    %v657 = vpop.f32.mrb[0].mxu0
    %v658 = vadd.f32 %v526, %v657
    %v659 = vpop.f32.mrb[0].mxu0
    %v660 = vadd.f32 %v530, %v659
    %661 = vmatprep.mubr.f32.mxu0 0.0
    %662 = vmatmul.mubr.f32.gmra.mrb[0].mxu0 %v450
    %v663 = vpop.f32.mrb[0].mxu0
    %v664 = vadd.f32 %v526, %v663
    %v665 = vpop.f32.mrb[0].mxu0
    %v666 = vadd.f32 %v530, %v665
    %667 = vmatprep.mubr.f32.mxu0 0.0
    %668 = vmatmul.mubr.f32.gmra.mrb[0].mxu0 %v451
    %v669 = vpop.f32.mrb[0].mxu0
    %v670 = vadd.f32 %v526, %v669
    %v671 = vpop.f32.mrb[0].mxu0
    %v672 = vadd.f32 %v530, %v671
    %673 = vmatprep.mubr.f32.mxu0 0.0
    %674 = vmatmul.mubr.f32.gmra.mrb[0].mxu0 %v452
    %v675 = vpop.f32.mrb[0].mxu0
    %v676 = vadd.f32 %v526, %v675
    %v677 = vpop.f32.mrb[0].mxu0
    %v678 = vadd.f32 %v530, %v677
    %679 = vmatprep.mubr.f32.mxu0 0.0
    %680 = vmatmul.mubr.f32.gmra.mrb[0].mxu0 %v453
    %v681 = vpop.f32.mrb[0].mxu0
    %v682 = vadd.f32 %v526, %v681
    %v683 = vpop.f32.mrb[0].mxu0
    %v684 = vadd.f32 %v530, %v683
    %685 = vmatprep.mubr.f32.mxu0 0.0
    %686 = vmatmul.mubr.f32.gmra.mrb[0].mxu0 %v454
    %v687 = vpop.f32.mrb[0].mxu0
    %v688 = vadd.f32 %v526, %v687
    %v689 = vpop.f32.mrb[0].mxu0
    %v690 = vadd.f32 %v530, %v689
    %691 = vmatprep.mubr.f32.mxu0 0.0
    %692 = vmatmul.mubr.f32.gmra.mrb[0].mxu0 %v455
    %v693 = vpop.f32.mrb[0].mxu0
    %v694 = vadd.f32 %v526, %v693
    %v695 = vpop.f32.mrb[0].mxu0
    %v696 = vadd.f32 %v530, %v695
    %697 = vmatprep.mubr.f32.mxu0 0.0
    %698 = vmatmul.mubr.f32.gmra.mrb[0].mxu0 %v456
    %v699 = vpop.f32.mrb[0].mxu0
    %v700 = vadd.f32 %v526, %v699
    %v701 = vpop.f32.mrb[0].mxu0
    %v702 = vadd.f32 %v530, %v701
    %703 = vdwg.mxu0
    %704 = vmatprep.subr.mxu0 %v460
    %705 = vmatpush1.msra.mxu0 %v459
    %706 = vmatprep.subr.mxu0 %v464
    %707 = vmatpush1.msra.mxu0 %v463
    %708 = vmatprep.subr.mxu0 %v468
    %709 = vmatpush1.msra.mxu0 %v467
    %710 = vmatprep.subr.mxu0 %v472
    %711 = vmatpush1.msra.mxu0 %v471
    %712 = vmatprep.subr.mxu0 %v476
    %713 = vmatpush1.msra.mxu0 %v475
    %714 = vmatprep.subr.mxu0 %v480
    %715 = vmatpush1.msra.mxu0 %v479
    %716 = vmatprep.subr.mxu0 %v484
    %717 = vmatpush1.msra.mxu0 %v483
    %718 = vmatprep.subr.mxu0 %v488
    %719 = vmatpush1.msra.mxu0 %v487
    %720 = vmatprep.subr.mxu0 %v492
    %721 = vmatpush1.msra.mxu0 %v491
    %722 = vmatprep.subr.mxu0 %v496
    %723 = vmatpush1.msra.mxu0 %v495
    %724 = vmatprep.subr.mxu0 %v500
    %725 = vmatpush1.msra.mxu0 %v499
    %726 = vmatprep.subr.mxu0 %v504
    %727 = vmatpush1.msra.mxu0 %v503
    %728 = vmatprep.subr.mxu0 %v508
    %729 = vmatpush1.msra.mxu0 %v507
    %730 = vmatprep.subr.mxu0 %v512
    %731 = vmatpush1.msra.mxu0 %v511
    %732 = vmatprep.subr.mxu0 %v516
    %733 = vmatpush1.msra.mxu0 %v515
    %734 = vmatprep.subr.mxu0 %v520
    %735 = vmatpush1.msra.mxu0 %v519
    %736 = vmatprep.subr.mxu0 0.0
    %737 = vmatpush1.msra.mxu0 0.0
    %738 = vmatprep.subr.mxu0 0.0
    %739 = vmatpush1.msra.mxu0 0.0
    %740 = vmatprep.subr.mxu0 0.0
    %741 = vmatpush1.msra.mxu0 0.0
    %742 = vmatprep.subr.mxu0 0.0
    %743 = vmatpush1.msra.mxu0 0.0
    %744 = vmatprep.subr.mxu0 0.0
    %745 = vmatpush1.msra.mxu0 0.0
    %746 = vmatprep.subr.mxu0 0.0
    %747 = vmatpush1.msra.mxu0 0.0
    %748 = vmatprep.subr.mxu0 0.0
    %749 = vmatpush1.msra.mxu0 0.0
    %750 = vmatprep.subr.mxu0 0.0
    %751 = vmatpush1.msra.mxu0 0.0
    %752 = vmatprep.subr.mxu0 0.0
    %753 = vmatpush1.msra.mxu0 0.0
    %754 = vmatprep.subr.mxu0 0.0
    %755 = vmatpush1.msra.mxu0 0.0
    %756 = vmatprep.subr.mxu0 0.0
    %757 = vmatpush1.msra.mxu0 0.0
    %758 = vmatprep.subr.mxu0 0.0
    %759 = vmatpush1.msra.mxu0 0.0
    %760 = vmatprep.subr.mxu0 0.0
    %761 = vmatpush1.msra.mxu0 0.0
    %762 = vmatprep.subr.mxu0 0.0
    %763 = vmatpush1.msra.mxu0 0.0
    %764 = vmatprep.subr.mxu0 0.0
    %765 = vmatpush1.msra.mxu0 0.0
    %766 = vmatprep.subr.mxu0 0.0
    %767 = vmatpush1.msra.mxu0 0.0
    %768 = vmatprep.mubr.f32.mxu0 0.0
    %769 = vmatmul.mubr.f32.gmra.mrb[0].mxu0 %v441
    %v770 = vpop.f32.mrb[0].mxu0
    %v771 = vadd.f32 %v534, %v770
    %v772 = vpop.f32.mrb[0].mxu0
    %v773 = vadd.f32 %v538, %v772
    %774 = vmatprep.mubr.f32.mxu0 0.0
    %775 = vmatmul.mubr.f32.gmra.mrb[0].mxu0 %v442
    %v776 = vpop.f32.mrb[0].mxu0
    %v777 = vadd.f32 %v534, %v776
    %v778 = vpop.f32.mrb[0].mxu0
    %v779 = vadd.f32 %v538, %v778
    %780 = vmatprep.mubr.f32.mxu0 0.0
    %781 = vmatmul.mubr.f32.gmra.mrb[0].mxu0 %v443
    %v782 = vpop.f32.mrb[0].mxu0
    %v783 = vadd.f32 %v534, %v782
    %v784 = vpop.f32.mrb[0].mxu0
    %v785 = vadd.f32 %v538, %v784
    %786 = vmatprep.mubr.f32.mxu0 0.0
    %787 = vmatmul.mubr.f32.gmra.mrb[0].mxu0 %v444
    %v788 = vpop.f32.mrb[0].mxu0
    %v789 = vadd.f32 %v534, %v788
    %v790 = vpop.f32.mrb[0].mxu0
    %v791 = vadd.f32 %v538, %v790
    %792 = vmatprep.mubr.f32.mxu0 0.0
    %793 = vmatmul.mubr.f32.gmra.mrb[0].mxu0 %v445
    %v794 = vpop.f32.mrb[0].mxu0
    %v795 = vadd.f32 %v534, %v794
    %v796 = vpop.f32.mrb[0].mxu0
    %v797 = vadd.f32 %v538, %v796
    %798 = vmatprep.mubr.f32.mxu0 0.0
    %799 = vmatmul.mubr.f32.gmra.mrb[0].mxu0 %v446
    %v800 = vpop.f32.mrb[0].mxu0
    %v801 = vadd.f32 %v534, %v800
    %v802 = vpop.f32.mrb[0].mxu0
    %v803 = vadd.f32 %v538, %v802
    %804 = vmatprep.mubr.f32.mxu0 0.0
    %805 = vmatmul.mubr.f32.gmra.mrb[0].mxu0 %v447
    %v806 = vpop.f32.mrb[0].mxu0
    %v807 = vadd.f32 %v534, %v806
    %v808 = vpop.f32.mrb[0].mxu0
    %v809 = vadd.f32 %v538, %v808
    %810 = vmatprep.mubr.f32.mxu0 0.0
    %811 = vmatmul.mubr.f32.gmra.mrb[0].mxu0 %v448
    %v812 = vpop.f32.mrb[0].mxu0
    %v813 = vadd.f32 %v534, %v812
    %v814 = vpop.f32.mrb[0].mxu0
    %v815 = vadd.f32 %v538, %v814
    %816 = vmatprep.mubr.f32.mxu0 0.0
    %817 = vmatmul.mubr.f32.gmra.mrb[0].mxu0 %v449
    %v818 = vpop.f32.mrb[0].mxu0
    %v819 = vadd.f32 %v534, %v818
    %v820 = vpop.f32.mrb[0].mxu0
    %v821 = vadd.f32 %v538, %v820
    %822 = vmatprep.mubr.f32.mxu0 0.0
    %823 = vmatmul.mubr.f32.gmra.mrb[0].mxu0 %v450
    %v824 = vpop.f32.mrb[0].mxu0
    %v825 = vadd.f32 %v534, %v824
    %v826 = vpop.f32.mrb[0].mxu0
    %v827 = vadd.f32 %v538, %v826
    %828 = vmatprep.mubr.f32.mxu0 0.0
    %829 = vmatmul.mubr.f32.gmra.mrb[0].mxu0 %v451
    %v830 = vpop.f32.mrb[0].mxu0
    %v831 = vadd.f32 %v534, %v830
    %v832 = vpop.f32.mrb[0].mxu0
    %v833 = vadd.f32 %v538, %v832
    %834 = vmatprep.mubr.f32.mxu0 0.0
    %835 = vmatmul.mubr.f32.gmra.mrb[0].mxu0 %v452
    %v836 = vpop.f32.mrb[0].mxu0
    %v837 = vadd.f32 %v534, %v836
    %v838 = vpop.f32.mrb[0].mxu0
    %v839 = vadd.f32 %v538, %v838
    %840 = vmatprep.mubr.f32.mxu0 0.0
    %841 = vmatmul.mubr.f32.gmra.mrb[0].mxu0 %v453
    %v842 = vpop.f32.mrb[0].mxu0
    %v843 = vadd.f32 %v534, %v842
    %v844 = vpop.f32.mrb[0].mxu0
    %v845 = vadd.f32 %v538, %v844
    %846 = vmatprep.mubr.f32.mxu0 0.0
    %847 = vmatmul.mubr.f32.gmra.mrb[0].mxu0 %v454
    %v848 = vpop.f32.mrb[0].mxu0
    %v849 = vadd.f32 %v534, %v848
    %v850 = vpop.f32.mrb[0].mxu0
    %v851 = vadd.f32 %v538, %v850
    %852 = vmatprep.mubr.f32.mxu0 0.0
    %853 = vmatmul.mubr.f32.gmra.mrb[0].mxu0 %v455
    %v854 = vpop.f32.mrb[0].mxu0
    %v855 = vadd.f32 %v534, %v854
    %v856 = vpop.f32.mrb[0].mxu0
    %v857 = vadd.f32 %v538, %v856
    %858 = vmatprep.mubr.f32.mxu0 0.0
    %859 = vmatmul.mubr.f32.gmra.mrb[0].mxu0 %v456
    %v860 = vpop.f32.mrb[0].mxu0
    %v861 = vadd.f32 %v534, %v860
    %v862 = vpop.f32.mrb[0].mxu0
    %v863 = vadd.f32 %v538, %v862
    %864 = vdwg.mxu0
    %v865 = vmax.f32 %v610, 0.0
    %v866 = vmax.f32 %v612, 0.0
    %v867 = vmax.f32 %v771, 0.0
    %v868 = vmax.f32 %v773, 0.0
    %v869 = vmax.f32 %v616, 0.0
    %v870 = vmax.f32 %v618, 0.0
    %v871 = vmax.f32 %v777, 0.0
    %v872 = vmax.f32 %v779, 0.0
    %v873 = vmax.f32 %v622, 0.0
    %v874 = vmax.f32 %v624, 0.0
    %v875 = vmax.f32 %v783, 0.0
    %v876 = vmax.f32 %v785, 0.0
    %v877 = vmax.f32 %v628, 0.0
    %v878 = vmax.f32 %v630, 0.0
    %v879 = vmax.f32 %v789, 0.0
    %v880 = vmax.f32 %v791, 0.0
    %v881 = vmax.f32 %v634, 0.0
    %v882 = vmax.f32 %v636, 0.0
    %v883 = vmax.f32 %v795, 0.0
    %v884 = vmax.f32 %v797, 0.0
    %v885 = vmax.f32 %v640, 0.0
    %v886 = vmax.f32 %v642, 0.0
    %v887 = vmax.f32 %v801, 0.0
    %v888 = vmax.f32 %v803, 0.0
    %v889 = vmax.f32 %v646, 0.0
    %v890 = vmax.f32 %v648, 0.0
    %v891 = vmax.f32 %v807, 0.0
    %v892 = vmax.f32 %v809, 0.0
    %v893 = vmax.f32 %v652, 0.0
    %v894 = vmax.f32 %v654, 0.0
    %v895 = vmax.f32 %v813, 0.0
    %v896 = vmax.f32 %v815, 0.0
    %v897 = vmax.f32 %v658, 0.0
    %v898 = vmax.f32 %v660, 0.0
    %v899 = vmax.f32 %v819, 0.0
    %v900 = vmax.f32 %v821, 0.0
    %v901 = vmax.f32 %v664, 0.0
    %v902 = vmax.f32 %v666, 0.0
    %v903 = vmax.f32 %v825, 0.0
    %v904 = vmax.f32 %v827, 0.0
    %v905 = vmax.f32 %v670, 0.0
    %v906 = vmax.f32 %v672, 0.0
    %v907 = vmax.f32 %v831, 0.0
    %v908 = vmax.f32 %v833, 0.0
    %v909 = vmax.f32 %v676, 0.0
    %v910 = vmax.f32 %v678, 0.0
    %v911 = vmax.f32 %v837, 0.0
    %v912 = vmax.f32 %v839, 0.0
    %v913 = vmax.f32 %v682, 0.0
    %v914 = vmax.f32 %v684, 0.0
    %v915 = vmax.f32 %v843, 0.0
    %v916 = vmax.f32 %v845, 0.0
    %v917 = vmax.f32 %v688, 0.0
    %v918 = vmax.f32 %v690, 0.0
    %v919 = vmax.f32 %v849, 0.0
    %v920 = vmax.f32 %v851, 0.0
    %v921 = vmax.f32 %v694, 0.0
    %v922 = vmax.f32 %v696, 0.0
    %v923 = vmax.f32 %v855, 0.0
    %v924 = vmax.f32 %v857, 0.0
    %v925 = vmax.f32 %v700, 0.0
    %v926 = vmax.f32 %v702, 0.0
    %v927 = vmax.f32 %v861, 0.0
    %v928 = vmax.f32 %v863, 0.0
    %v929 = vld [vmem:[#allocation7] sm:$0xff]
    %v930 = vld [vmem:[#allocation7 + $0x8] sm:$0xff]
    %v931 = vld [vmem:[#allocation7 + $0x10] sm:$0xff]
    %v932 = vld [vmem:[#allocation7 + $0x18] sm:$0xff]
    %v933 = vld [vmem:[#allocation7 + $0x20] sm:$0xff]
    %v934 = vld [vmem:[#allocation7 + $0x28] sm:$0xff]
    %v935 = vld [vmem:[#allocation7 + $0x30] sm:$0xff]
    %v936 = vld [vmem:[#allocation7 + $0x38] sm:$0xff]
    %v937 = vld [vmem:[#allocation7 + $0x40] sm:$0xff]
    %v938 = vld [vmem:[#allocation7 + $0x48] sm:$0xff]
    %v939 = vld [vmem:[#allocation7 + $0x50] sm:$0xff]
    %v940 = vld [vmem:[#allocation7 + $0x58] sm:$0xff]
    %v941 = vld [vmem:[#allocation7 + $0x60] sm:$0xff]
    %v942 = vld [vmem:[#allocation7 + $0x68] sm:$0xff]
    %v943 = vld [vmem:[#allocation7 + $0x70] sm:$0xff]
    %v944 = vld [vmem:[#allocation7 + $0x78] sm:$0xff]
    %v945 = vld [vmem:[#allocation7 + $0x80] sm:$0xff]
    %v946 = vld [vmem:[#allocation7 + $0x88] sm:$0xff]
    %v947 = vld [vmem:[#allocation7 + $0x90] sm:$0xff]
    %v948 = vld [vmem:[#allocation7 + $0x98] sm:$0xff]
    %v949 = vld [vmem:[#allocation7 + $0xa0] sm:$0xff]
    %v950 = vld [vmem:[#allocation7 + $0xa8] sm:$0xff]
    %v951 = vld [vmem:[#allocation7 + $0xb0] sm:$0xff]
    %v952 = vld [vmem:[#allocation7 + $0xb8] sm:$0xff]
    %v953 = vld [vmem:[#allocation7 + $0xc0] sm:$0xff]
    %v954 = vld [vmem:[#allocation7 + $0xc8] sm:$0xff]
    %v955 = vld [vmem:[#allocation7 + $0xd0] sm:$0xff]
    %v956 = vld [vmem:[#allocation7 + $0xd8] sm:$0xff]
    %v957 = vld [vmem:[#allocation7 + $0xe0] sm:$0xff]
    %v958 = vld [vmem:[#allocation7 + $0xe8] sm:$0xff]
    %v959 = vld [vmem:[#allocation7 + $0xf0] sm:$0xff]
    %v960 = vld [vmem:[#allocation7 + $0xf8] sm:$0xff]
    %v961 = vld [vmem:[#allocation7 + $0x100] sm:$0xff]
    %v962 = vld [vmem:[#allocation7 + $0x108] sm:$0xff]
    %v963 = vld [vmem:[#allocation7 + $0x110] sm:$0xff]
    %v964 = vld [vmem:[#allocation7 + $0x118] sm:$0xff]
    %v965 = vld [vmem:[#allocation7 + $0x120] sm:$0xff]
    %v966 = vld [vmem:[#allocation7 + $0x128] sm:$0xff]
    %v967 = vld [vmem:[#allocation7 + $0x130] sm:$0xff]
    %v968 = vld [vmem:[#allocation7 + $0x138] sm:$0xff]
    %v969 = vld [vmem:[#allocation7 + $0x140] sm:$0xff]
    %v970 = vld [vmem:[#allocation7 + $0x148] sm:$0xff]
    %v971 = vld [vmem:[#allocation7 + $0x150] sm:$0xff]
    %v972 = vld [vmem:[#allocation7 + $0x158] sm:$0xff]
    %v973 = vld [vmem:[#allocation7 + $0x160] sm:$0xff]
    %v974 = vld [vmem:[#allocation7 + $0x168] sm:$0xff]
    %v975 = vld [vmem:[#allocation7 + $0x170] sm:$0xff]
    %v976 = vld [vmem:[#allocation7 + $0x178] sm:$0xff]
    %v977 = vld [vmem:[#allocation7 + $0x180] sm:$0xff]
    %v978 = vld [vmem:[#allocation7 + $0x188] sm:$0xff]
    %v979 = vld [vmem:[#allocation7 + $0x190] sm:$0xff]
    %v980 = vld [vmem:[#allocation7 + $0x198] sm:$0xff]
    %v981 = vld [vmem:[#allocation7 + $0x1a0] sm:$0xff]
    %v982 = vld [vmem:[#allocation7 + $0x1a8] sm:$0xff]
    %v983 = vld [vmem:[#allocation7 + $0x1b0] sm:$0xff]
    %v984 = vld [vmem:[#allocation7 + $0x1b8] sm:$0xff]
    %v985 = vld [vmem:[#allocation7 + $0x1c0] sm:$0xff]
    %v986 = vld [vmem:[#allocation7 + $0x1c8] sm:$0xff]
    %v987 = vld [vmem:[#allocation7 + $0x1d0] sm:$0xff]
    %v988 = vld [vmem:[#allocation7 + $0x1d8] sm:$0xff]
    %v989 = vld [vmem:[#allocation7 + $0x1e0] sm:$0xff]
    %v990 = vld [vmem:[#allocation7 + $0x1e8] sm:$0xff]
    %v991 = vld [vmem:[#allocation7 + $0x1f0] sm:$0xff]
    %v992 = vld [vmem:[#allocation7 + $0x1f8] sm:$0xff]
    %v993 = vld [vmem:[%s7] sm:$0x1]
    %v995 = vlaneseq
    %v996 = vshrl.u32 %v995, 7
    %v997 = vsub.s32 0, %v996
    %v998 = vrot.slane %v993, %v997
    %1000 = vmatprep.subr.mxu0 0.0
    %1001 = vmatpush1.msra.mxu0 %v929
    %1002 = vmatprep.subr.mxu0 0.0
    %1003 = vmatpush1.msra.mxu0 %v930
    %1004 = vmatprep.subr.mxu0 0.0
    %1005 = vmatpush1.msra.mxu0 %v931
    %1006 = vmatprep.subr.mxu0 0.0
    %1007 = vmatpush1.msra.mxu0 %v932
    %1008 = vmatprep.subr.mxu0 0.0
    %1009 = vmatpush1.msra.mxu0 %v933
    %1010 = vmatprep.subr.mxu0 0.0
    %1011 = vmatpush1.msra.mxu0 %v934
    %1012 = vmatprep.subr.mxu0 0.0
    %1013 = vmatpush1.msra.mxu0 %v935
    %1014 = vmatprep.subr.mxu0 0.0
    %1015 = vmatpush1.msra.mxu0 %v936
    %1016 = vmatprep.subr.mxu0 0.0
    %1017 = vmatpush1.msra.mxu0 %v937
    %1018 = vmatprep.subr.mxu0 0.0
    %1019 = vmatpush1.msra.mxu0 %v938
    %1020 = vmatprep.subr.mxu0 0.0
    %1021 = vmatpush1.msra.mxu0 %v939
    %1022 = vmatprep.subr.mxu0 0.0
    %1023 = vmatpush1.msra.mxu0 %v940
    %1024 = vmatprep.subr.mxu0 0.0
    %1025 = vmatpush1.msra.mxu0 %v941
    %1026 = vmatprep.subr.mxu0 0.0
    %1027 = vmatpush1.msra.mxu0 %v942
    %1028 = vmatprep.subr.mxu0 0.0
    %1029 = vmatpush1.msra.mxu0 %v943
    %1030 = vmatprep.subr.mxu0 0.0
    %1031 = vmatpush1.msra.mxu0 %v944
    %1032 = vmatprep.subr.mxu0 0.0
    %1033 = vmatpush1.msra.mxu0 %v945
    %1034 = vmatprep.subr.mxu0 0.0
    %1035 = vmatpush1.msra.mxu0 %v946
    %1036 = vmatprep.subr.mxu0 0.0
    %1037 = vmatpush1.msra.mxu0 %v947
    %1038 = vmatprep.subr.mxu0 0.0
    %1039 = vmatpush1.msra.mxu0 %v948
    %1040 = vmatprep.subr.mxu0 0.0
    %1041 = vmatpush1.msra.mxu0 %v949
    %1042 = vmatprep.subr.mxu0 0.0
    %1043 = vmatpush1.msra.mxu0 %v950
    %1044 = vmatprep.subr.mxu0 0.0
    %1045 = vmatpush1.msra.mxu0 %v951
    %1046 = vmatprep.subr.mxu0 0.0
    %1047 = vmatpush1.msra.mxu0 %v952
    %1048 = vmatprep.subr.mxu0 0.0
    %1049 = vmatpush1.msra.mxu0 %v953
    %1050 = vmatprep.subr.mxu0 0.0
    %1051 = vmatpush1.msra.mxu0 %v954
    %1052 = vmatprep.subr.mxu0 0.0
    %1053 = vmatpush1.msra.mxu0 %v955
    %1054 = vmatprep.subr.mxu0 0.0
    %1055 = vmatpush1.msra.mxu0 %v956
    %1056 = vmatprep.subr.mxu0 0.0
    %1057 = vmatpush1.msra.mxu0 %v957
    %1058 = vmatprep.subr.mxu0 0.0
    %1059 = vmatpush1.msra.mxu0 %v958
    %1060 = vmatprep.subr.mxu0 0.0
    %1061 = vmatpush1.msra.mxu0 %v959
    %1062 = vmatprep.subr.mxu0 0.0
    %1063 = vmatpush1.msra.mxu0 %v960
    %1064 = vmatprep.mubr.f32.mxu0 %v866
    %1065 = vmatmul.mubr.f32.gmra.mrb[0].mxu0 %v865
    %v1066 = vpop.f32.mrb[0].mxu0
    %v1067 = vadd.f32 %v998, %v1066
    %v1068 = vpop.f32.mrb[0].mxu0
    %1069 = vmatprep.mubr.f32.mxu0 %v870
    %1070 = vmatmul.mubr.f32.gmra.mrb[0].mxu0 %v869
    %v1071 = vpop.f32.mrb[0].mxu0
    %v1072 = vadd.f32 %v998, %v1071
    %v1073 = vpop.f32.mrb[0].mxu0
    %1074 = vmatprep.mubr.f32.mxu0 %v874
    %1075 = vmatmul.mubr.f32.gmra.mrb[0].mxu0 %v873
    %v1076 = vpop.f32.mrb[0].mxu0
    %v1077 = vadd.f32 %v998, %v1076
    %v1078 = vpop.f32.mrb[0].mxu0
    %1079 = vmatprep.mubr.f32.mxu0 %v878
    %1080 = vmatmul.mubr.f32.gmra.mrb[0].mxu0 %v877
    %v1081 = vpop.f32.mrb[0].mxu0
    %v1082 = vadd.f32 %v998, %v1081
    %v1083 = vpop.f32.mrb[0].mxu0
    %1084 = vmatprep.mubr.f32.mxu0 %v882
    %1085 = vmatmul.mubr.f32.gmra.mrb[0].mxu0 %v881
    %v1086 = vpop.f32.mrb[0].mxu0
    %v1087 = vadd.f32 %v998, %v1086
    %v1088 = vpop.f32.mrb[0].mxu0
    %1089 = vmatprep.mubr.f32.mxu0 %v886
    %1090 = vmatmul.mubr.f32.gmra.mrb[0].mxu0 %v885
    %v1091 = vpop.f32.mrb[0].mxu0
    %v1092 = vadd.f32 %v998, %v1091
    %v1093 = vpop.f32.mrb[0].mxu0
    %1094 = vmatprep.mubr.f32.mxu0 %v890
    %1095 = vmatmul.mubr.f32.gmra.mrb[0].mxu0 %v889
    %v1096 = vpop.f32.mrb[0].mxu0
    %v1097 = vadd.f32 %v998, %v1096
    %v1098 = vpop.f32.mrb[0].mxu0
    %1099 = vmatprep.mubr.f32.mxu0 %v894
    %1100 = vmatmul.mubr.f32.gmra.mrb[0].mxu0 %v893
    %v1101 = vpop.f32.mrb[0].mxu0
    %v1102 = vadd.f32 %v998, %v1101
    %v1103 = vpop.f32.mrb[0].mxu0
    %1104 = vmatprep.mubr.f32.mxu0 %v898
    %1105 = vmatmul.mubr.f32.gmra.mrb[0].mxu0 %v897
    %v1106 = vpop.f32.mrb[0].mxu0
    %v1107 = vadd.f32 %v998, %v1106
    %v1108 = vpop.f32.mrb[0].mxu0
    %1109 = vmatprep.mubr.f32.mxu0 %v902
    %1110 = vmatmul.mubr.f32.gmra.mrb[0].mxu0 %v901
    %v1111 = vpop.f32.mrb[0].mxu0
    %v1112 = vadd.f32 %v998, %v1111
    %v1113 = vpop.f32.mrb[0].mxu0
    %1114 = vmatprep.mubr.f32.mxu0 %v906
    %1115 = vmatmul.mubr.f32.gmra.mrb[0].mxu0 %v905
    %v1116 = vpop.f32.mrb[0].mxu0
    %v1117 = vadd.f32 %v998, %v1116
    %v1118 = vpop.f32.mrb[0].mxu0
    %1119 = vmatprep.mubr.f32.mxu0 %v910
    %1120 = vmatmul.mubr.f32.gmra.mrb[0].mxu0 %v909
    %v1121 = vpop.f32.mrb[0].mxu0
    %v1122 = vadd.f32 %v998, %v1121
    %v1123 = vpop.f32.mrb[0].mxu0
    %1124 = vmatprep.mubr.f32.mxu0 %v914
    %1125 = vmatmul.mubr.f32.gmra.mrb[0].mxu0 %v913
    %v1126 = vpop.f32.mrb[0].mxu0
    %v1127 = vadd.f32 %v998, %v1126
    %v1128 = vpop.f32.mrb[0].mxu0
    %1129 = vmatprep.mubr.f32.mxu0 %v918
    %1130 = vmatmul.mubr.f32.gmra.mrb[0].mxu0 %v917
    %v1131 = vpop.f32.mrb[0].mxu0
    %v1132 = vadd.f32 %v998, %v1131
    %v1133 = vpop.f32.mrb[0].mxu0
    %1134 = vmatprep.mubr.f32.mxu0 %v922
    %1135 = vmatmul.mubr.f32.gmra.mrb[0].mxu0 %v921
    %v1136 = vpop.f32.mrb[0].mxu0
    %v1137 = vadd.f32 %v998, %v1136
    %v1138 = vpop.f32.mrb[0].mxu0
    %1139 = vmatprep.mubr.f32.mxu0 %v926
    %1140 = vmatmul.mubr.f32.gmra.mrb[0].mxu0 %v925
    %v1141 = vpop.f32.mrb[0].mxu0
    %v1142 = vadd.f32 %v998, %v1141
    %v1143 = vpop.f32.mrb[0].mxu0
    %1144 = vdwg.mxu0
    %1145 = vmatprep.subr.mxu0 0.0
    %1146 = vmatpush1.msra.mxu0 %v961
    %1147 = vmatprep.subr.mxu0 0.0
    %1148 = vmatpush1.msra.mxu0 %v962
    %1149 = vmatprep.subr.mxu0 0.0
    %1150 = vmatpush1.msra.mxu0 %v963
    %1151 = vmatprep.subr.mxu0 0.0
    %1152 = vmatpush1.msra.mxu0 %v964
    %1153 = vmatprep.subr.mxu0 0.0
    %1154 = vmatpush1.msra.mxu0 %v965
    %1155 = vmatprep.subr.mxu0 0.0
    %1156 = vmatpush1.msra.mxu0 %v966
    %1157 = vmatprep.subr.mxu0 0.0
    %1158 = vmatpush1.msra.mxu0 %v967
    %1159 = vmatprep.subr.mxu0 0.0
    %1160 = vmatpush1.msra.mxu0 %v968
    %1161 = vmatprep.subr.mxu0 0.0
    %1162 = vmatpush1.msra.mxu0 %v969
    %1163 = vmatprep.subr.mxu0 0.0
    %1164 = vmatpush1.msra.mxu0 %v970
    %1165 = vmatprep.subr.mxu0 0.0
    %1166 = vmatpush1.msra.mxu0 %v971
    %1167 = vmatprep.subr.mxu0 0.0
    %1168 = vmatpush1.msra.mxu0 %v972
    %1169 = vmatprep.subr.mxu0 0.0
    %1170 = vmatpush1.msra.mxu0 %v973
    %1171 = vmatprep.subr.mxu0 0.0
    %1172 = vmatpush1.msra.mxu0 %v974
    %1173 = vmatprep.subr.mxu0 0.0
    %1174 = vmatpush1.msra.mxu0 %v975
    %1175 = vmatprep.subr.mxu0 0.0
    %1176 = vmatpush1.msra.mxu0 %v976
    %1177 = vmatprep.subr.mxu0 0.0
    %1178 = vmatpush1.msra.mxu0 %v977
    %1179 = vmatprep.subr.mxu0 0.0
    %1180 = vmatpush1.msra.mxu0 %v978
    %1181 = vmatprep.subr.mxu0 0.0
    %1182 = vmatpush1.msra.mxu0 %v979
    %1183 = vmatprep.subr.mxu0 0.0
    %1184 = vmatpush1.msra.mxu0 %v980
    %1185 = vmatprep.subr.mxu0 0.0
    %1186 = vmatpush1.msra.mxu0 %v981
    %1187 = vmatprep.subr.mxu0 0.0
    %1188 = vmatpush1.msra.mxu0 %v982
    %1189 = vmatprep.subr.mxu0 0.0
    %1190 = vmatpush1.msra.mxu0 %v983
    %1191 = vmatprep.subr.mxu0 0.0
    %1192 = vmatpush1.msra.mxu0 %v984
    %1193 = vmatprep.subr.mxu0 0.0
    %1194 = vmatpush1.msra.mxu0 %v985
    %1195 = vmatprep.subr.mxu0 0.0
    %1196 = vmatpush1.msra.mxu0 %v986
    %1197 = vmatprep.subr.mxu0 0.0
    %1198 = vmatpush1.msra.mxu0 %v987
    %1199 = vmatprep.subr.mxu0 0.0
    %1200 = vmatpush1.msra.mxu0 %v988
    %1201 = vmatprep.subr.mxu0 0.0
    %1202 = vmatpush1.msra.mxu0 %v989
    %1203 = vmatprep.subr.mxu0 0.0
    %1204 = vmatpush1.msra.mxu0 %v990
    %1205 = vmatprep.subr.mxu0 0.0
    %1206 = vmatpush1.msra.mxu0 %v991
    %1207 = vmatprep.subr.mxu0 0.0
    %1208 = vmatpush1.msra.mxu0 %v992
    %1209 = vmatprep.mubr.f32.mxu0 %v868
    %1210 = vmatmul.mubr.f32.gmra.mrb[0].mxu0 %v867
    %v1211 = vpop.f32.mrb[0].mxu0
    %v1212 = vadd.f32 %v1067, %v1211
    %v1213 = vpop.f32.mrb[0].mxu0
    %1214 = vmatprep.mubr.f32.mxu0 %v872
    %1215 = vmatmul.mubr.f32.gmra.mrb[0].mxu0 %v871
    %v1216 = vpop.f32.mrb[0].mxu0
    %v1217 = vadd.f32 %v1072, %v1216
    %v1218 = vpop.f32.mrb[0].mxu0
    %1219 = vmatprep.mubr.f32.mxu0 %v876
    %1220 = vmatmul.mubr.f32.gmra.mrb[0].mxu0 %v875
    %v1221 = vpop.f32.mrb[0].mxu0
    %v1222 = vadd.f32 %v1077, %v1221
    %v1223 = vpop.f32.mrb[0].mxu0
    %1224 = vmatprep.mubr.f32.mxu0 %v880
    %1225 = vmatmul.mubr.f32.gmra.mrb[0].mxu0 %v879
    %v1226 = vpop.f32.mrb[0].mxu0
    %v1227 = vadd.f32 %v1082, %v1226
    %v1228 = vpop.f32.mrb[0].mxu0
    %1229 = vmatprep.mubr.f32.mxu0 %v884
    %1230 = vmatmul.mubr.f32.gmra.mrb[0].mxu0 %v883
    %v1231 = vpop.f32.mrb[0].mxu0
    %v1232 = vadd.f32 %v1087, %v1231
    %v1233 = vpop.f32.mrb[0].mxu0
    %1234 = vmatprep.mubr.f32.mxu0 %v888
    %1235 = vmatmul.mubr.f32.gmra.mrb[0].mxu0 %v887
    %v1236 = vpop.f32.mrb[0].mxu0
    %v1237 = vadd.f32 %v1092, %v1236
    %v1238 = vpop.f32.mrb[0].mxu0
    %1239 = vmatprep.mubr.f32.mxu0 %v892
    %1240 = vmatmul.mubr.f32.gmra.mrb[0].mxu0 %v891
    %v1241 = vpop.f32.mrb[0].mxu0
    %v1242 = vadd.f32 %v1097, %v1241
    %v1243 = vpop.f32.mrb[0].mxu0
    %1244 = vmatprep.mubr.f32.mxu0 %v896
    %1245 = vmatmul.mubr.f32.gmra.mrb[0].mxu0 %v895
    %v1246 = vpop.f32.mrb[0].mxu0
    %v1247 = vadd.f32 %v1102, %v1246
    %v1248 = vpop.f32.mrb[0].mxu0
    %1249 = vmatprep.mubr.f32.mxu0 %v900
    %1250 = vmatmul.mubr.f32.gmra.mrb[0].mxu0 %v899
    %v1251 = vpop.f32.mrb[0].mxu0
    %v1252 = vadd.f32 %v1107, %v1251
    %v1253 = vpop.f32.mrb[0].mxu0
    %1254 = vmatprep.mubr.f32.mxu0 %v904
    %1255 = vmatmul.mubr.f32.gmra.mrb[0].mxu0 %v903
    %v1256 = vpop.f32.mrb[0].mxu0
    %v1257 = vadd.f32 %v1112, %v1256
    %v1258 = vpop.f32.mrb[0].mxu0
    %1259 = vmatprep.mubr.f32.mxu0 %v908
    %1260 = vmatmul.mubr.f32.gmra.mrb[0].mxu0 %v907
    %v1261 = vpop.f32.mrb[0].mxu0
    %v1262 = vadd.f32 %v1117, %v1261
    %v1263 = vpop.f32.mrb[0].mxu0
    %1264 = vmatprep.mubr.f32.mxu0 %v912
    %1265 = vmatmul.mubr.f32.gmra.mrb[0].mxu0 %v911
    %v1266 = vpop.f32.mrb[0].mxu0
    %v1267 = vadd.f32 %v1122, %v1266
    %v1268 = vpop.f32.mrb[0].mxu0
    %1269 = vmatprep.mubr.f32.mxu0 %v916
    %1270 = vmatmul.mubr.f32.gmra.mrb[0].mxu0 %v915
    %v1271 = vpop.f32.mrb[0].mxu0
    %v1272 = vadd.f32 %v1127, %v1271
    %v1273 = vpop.f32.mrb[0].mxu0
    %1274 = vmatprep.mubr.f32.mxu0 %v920
    %1275 = vmatmul.mubr.f32.gmra.mrb[0].mxu0 %v919
    %v1276 = vpop.f32.mrb[0].mxu0
    %v1277 = vadd.f32 %v1132, %v1276
    %v1278 = vpop.f32.mrb[0].mxu0
    %1279 = vmatprep.mubr.f32.mxu0 %v924
    %1280 = vmatmul.mubr.f32.gmra.mrb[0].mxu0 %v923
    %v1281 = vpop.f32.mrb[0].mxu0
    %v1282 = vadd.f32 %v1137, %v1281
    %v1283 = vpop.f32.mrb[0].mxu0
    %1284 = vmatprep.mubr.f32.mxu0 %v928
    %1285 = vmatmul.mubr.f32.gmra.mrb[0].mxu0 %v927
    %v1286 = vpop.f32.mrb[0].mxu0
    %v1287 = vadd.f32 %v1142, %v1286
    %v1288 = vpop.f32.mrb[0].mxu0
    %1289 = vdwg.mxu0
    %v1290 = vld [vmem:[%s1] sm:$0xff]
    %v1291 = vld [vmem:[%s1 + $0x8] sm:$0xff]
    %v1292 = vld [vmem:[%s1 + $0x10] sm:$0xff]
    %v1293 = vld [vmem:[%s1 + $0x18] sm:$0xff]
    %v1294 = vld [vmem:[%s1 + $0x20] sm:$0xff]
    %v1295 = vld [vmem:[%s1 + $0x28] sm:$0xff]
    %v1296 = vld [vmem:[%s1 + $0x30] sm:$0xff]
    %v1297 = vld [vmem:[%s1 + $0x38] sm:$0xff]
    %v1298 = vld [vmem:[%s1 + $0x40] sm:$0xff]
    %v1299 = vld [vmem:[%s1 + $0x48] sm:$0xff]
    %v1300 = vld [vmem:[%s1 + $0x50] sm:$0xff]
    %v1301 = vld [vmem:[%s1 + $0x58] sm:$0xff]
    %v1302 = vld [vmem:[%s1 + $0x60] sm:$0xff]
    %v1303 = vld [vmem:[%s1 + $0x68] sm:$0xff]
    %v1304 = vld [vmem:[%s1 + $0x70] sm:$0xff]
    %v1305 = vld [vmem:[%s1 + $0x78] sm:$0xff]
    %v1306 = vld [vmem:[%s3] sm:$0xf]
    %vm1307 = vcmask 31744
    %v1309 = vsel %vm1307, %v1290, 0
    %v1312 = vsel %vm1307, %v1291, 0
    %v1315 = vsel %vm1307, %v1292, 0
    %v1318 = vsel %vm1307, %v1293, 0
    %v1321 = vsel %vm1307, %v1294, 0
    %v1324 = vsel %vm1307, %v1295, 0
    %v1327 = vsel %vm1307, %v1296, 0
    %v1330 = vsel %vm1307, %v1297, 0
    %v1333 = vsel %vm1307, %v1298, 0
    %v1336 = vsel %vm1307, %v1299, 0
    %v1339 = vsel %vm1307, %v1300, 0
    %v1342 = vsel %vm1307, %v1301, 0
    %v1345 = vsel %vm1307, %v1302, 0
    %v1348 = vsel %vm1307, %v1303, 0
    %v1351 = vsel %vm1307, %v1304, 0
    %v1354 = vsel %vm1307, %v1305, 0
    %vm1356 = vcmask 1043456
    %v1358 = vsel %vm1356, %v1306, 0
    %1360 = vmatprep.subr.mxu0 0.0
    %1361 = vmatpush1.msra.mxu0 %v1358
    %1362 = vmatprep.subr.mxu0 0.0
    %1363 = vmatpush1.msra.mxu0 0.0
    %1364 = vmatprep.subr.mxu0 0.0
    %1365 = vmatpush1.msra.mxu0 0.0
    %1366 = vmatprep.subr.mxu0 0.0
    %1367 = vmatpush1.msra.mxu0 0.0
    %1368 = vmatprep.subr.mxu0 0.0
    %1369 = vmatpush1.msra.mxu0 0.0
    %1370 = vmatprep.subr.mxu0 0.0
    %1371 = vmatpush1.msra.mxu0 0.0
    %1372 = vmatprep.subr.mxu0 0.0
    %1373 = vmatpush1.msra.mxu0 0.0
    %1374 = vmatprep.subr.mxu0 0.0
    %1375 = vmatpush1.msra.mxu0 0.0
    %1376 = vmatprep.subr.mxu0 0.0
    %1377 = vmatpush1.msra.mxu0 0.0
    %1378 = vmatprep.subr.mxu0 0.0
    %1379 = vmatpush1.msra.mxu0 0.0
    %1380 = vmatprep.subr.mxu0 0.0
    %1381 = vmatpush1.msra.mxu0 0.0
    %1382 = vmatprep.subr.mxu0 0.0
    %1383 = vmatpush1.msra.mxu0 0.0
    %1384 = vmatprep.subr.mxu0 0.0
    %1385 = vmatpush1.msra.mxu0 0.0
    %1386 = vmatprep.subr.mxu0 0.0
    %1387 = vmatpush1.msra.mxu0 0.0
    %1388 = vmatprep.subr.mxu0 0.0
    %1389 = vmatpush1.msra.mxu0 0.0
    %1390 = vmatprep.subr.mxu0 0.0
    %1391 = vmatpush1.msra.mxu0 0.0
    %1392 = vmatprep.subr.mxu0 0.0
    %1393 = vmatpush1.msra.mxu0 0.0
    %1394 = vmatprep.subr.mxu0 0.0
    %1395 = vmatpush1.msra.mxu0 0.0
    %1396 = vmatprep.subr.mxu0 0.0
    %1397 = vmatpush1.msra.mxu0 0.0
    %1398 = vmatprep.subr.mxu0 0.0
    %1399 = vmatpush1.msra.mxu0 0.0
    %1400 = vmatprep.subr.mxu0 0.0
    %1401 = vmatpush1.msra.mxu0 0.0
    %1402 = vmatprep.subr.mxu0 0.0
    %1403 = vmatpush1.msra.mxu0 0.0
    %1404 = vmatprep.subr.mxu0 0.0
    %1405 = vmatpush1.msra.mxu0 0.0
    %1406 = vmatprep.subr.mxu0 0.0
    %1407 = vmatpush1.msra.mxu0 0.0
    %1408 = vmatprep.subr.mxu0 0.0
    %1409 = vmatpush1.msra.mxu0 0.0
    %1410 = vmatprep.subr.mxu0 0.0
    %1411 = vmatpush1.msra.mxu0 0.0
    %1412 = vmatprep.subr.mxu0 0.0
    %1413 = vmatpush1.msra.mxu0 0.0
    %1414 = vmatprep.subr.mxu0 0.0
    %1415 = vmatpush1.msra.mxu0 0.0
    %1416 = vmatprep.subr.mxu0 0.0
    %1417 = vmatpush1.msra.mxu0 0.0
    %1418 = vmatprep.subr.mxu0 0.0
    %1419 = vmatpush1.msra.mxu0 0.0
    %1420 = vmatprep.subr.mxu0 0.0
    %1421 = vmatpush1.msra.mxu0 0.0
    %1422 = vmatprep.subr.mxu0 0.0
    %1423 = vmatpush1.msra.mxu0 0.0
    %1424 = vmatprep.mubr.f32.mxu0 0.0
    %1425 = vmatmul.mubr.f32.gmra.mrb[0].mxu0 %v1309
    %v1426 = vpop.f32.mrb[0].mxu0
    %v1427 = vadd.f32 0.0, %v1426
    %v1428 = vpop.f32.mrb[0].mxu0
    %1429 = vmatprep.mubr.f32.mxu0 0.0
    %1430 = vmatmul.mubr.f32.gmra.mrb[0].mxu0 %v1312
    %v1431 = vpop.f32.mrb[0].mxu0
    %v1432 = vadd.f32 0.0, %v1431
    %v1433 = vpop.f32.mrb[0].mxu0
    %1434 = vmatprep.mubr.f32.mxu0 0.0
    %1435 = vmatmul.mubr.f32.gmra.mrb[0].mxu0 %v1315
    %v1436 = vpop.f32.mrb[0].mxu0
    %v1437 = vadd.f32 0.0, %v1436
    %v1438 = vpop.f32.mrb[0].mxu0
    %1439 = vmatprep.mubr.f32.mxu0 0.0
    %1440 = vmatmul.mubr.f32.gmra.mrb[0].mxu0 %v1318
    %v1441 = vpop.f32.mrb[0].mxu0
    %v1442 = vadd.f32 0.0, %v1441
    %v1443 = vpop.f32.mrb[0].mxu0
    %1444 = vmatprep.mubr.f32.mxu0 0.0
    %1445 = vmatmul.mubr.f32.gmra.mrb[0].mxu0 %v1321
    %v1446 = vpop.f32.mrb[0].mxu0
    %v1447 = vadd.f32 0.0, %v1446
    %v1448 = vpop.f32.mrb[0].mxu0
    %1449 = vmatprep.mubr.f32.mxu0 0.0
    %1450 = vmatmul.mubr.f32.gmra.mrb[0].mxu0 %v1324
    %v1451 = vpop.f32.mrb[0].mxu0
    %v1452 = vadd.f32 0.0, %v1451
    %v1453 = vpop.f32.mrb[0].mxu0
    %1454 = vmatprep.mubr.f32.mxu0 0.0
    %1455 = vmatmul.mubr.f32.gmra.mrb[0].mxu0 %v1327
    %v1456 = vpop.f32.mrb[0].mxu0
    %v1457 = vadd.f32 0.0, %v1456
    %v1458 = vpop.f32.mrb[0].mxu0
    %1459 = vmatprep.mubr.f32.mxu0 0.0
    %1460 = vmatmul.mubr.f32.gmra.mrb[0].mxu0 %v1330
    %v1461 = vpop.f32.mrb[0].mxu0
    %v1462 = vadd.f32 0.0, %v1461
    %v1463 = vpop.f32.mrb[0].mxu0
    %1464 = vmatprep.mubr.f32.mxu0 0.0
    %1465 = vmatmul.mubr.f32.gmra.mrb[0].mxu0 %v1333
    %v1466 = vpop.f32.mrb[0].mxu0
    %v1467 = vadd.f32 0.0, %v1466
    %v1468 = vpop.f32.mrb[0].mxu0
    %1469 = vmatprep.mubr.f32.mxu0 0.0
    %1470 = vmatmul.mubr.f32.gmra.mrb[0].mxu0 %v1336
    %v1471 = vpop.f32.mrb[0].mxu0
    %v1472 = vadd.f32 0.0, %v1471
    %v1473 = vpop.f32.mrb[0].mxu0
    %1474 = vmatprep.mubr.f32.mxu0 0.0
    %1475 = vmatmul.mubr.f32.gmra.mrb[0].mxu0 %v1339
    %v1476 = vpop.f32.mrb[0].mxu0
    %v1477 = vadd.f32 0.0, %v1476
    %v1478 = vpop.f32.mrb[0].mxu0
    %1479 = vmatprep.mubr.f32.mxu0 0.0
    %1480 = vmatmul.mubr.f32.gmra.mrb[0].mxu0 %v1342
    %v1481 = vpop.f32.mrb[0].mxu0
    %v1482 = vadd.f32 0.0, %v1481
    %v1483 = vpop.f32.mrb[0].mxu0
    %1484 = vmatprep.mubr.f32.mxu0 0.0
    %1485 = vmatmul.mubr.f32.gmra.mrb[0].mxu0 %v1345
    %v1486 = vpop.f32.mrb[0].mxu0
    %v1487 = vadd.f32 0.0, %v1486
    %v1488 = vpop.f32.mrb[0].mxu0
    %1489 = vmatprep.mubr.f32.mxu0 0.0
    %1490 = vmatmul.mubr.f32.gmra.mrb[0].mxu0 %v1348
    %v1491 = vpop.f32.mrb[0].mxu0
    %v1492 = vadd.f32 0.0, %v1491
    %v1493 = vpop.f32.mrb[0].mxu0
    %1494 = vmatprep.mubr.f32.mxu0 0.0
    %1495 = vmatmul.mubr.f32.gmra.mrb[0].mxu0 %v1351
    %v1496 = vpop.f32.mrb[0].mxu0
    %v1497 = vadd.f32 0.0, %v1496
    %v1498 = vpop.f32.mrb[0].mxu0
    %1499 = vmatprep.mubr.f32.mxu0 0.0
    %1500 = vmatmul.mubr.f32.gmra.mrb[0].mxu0 %v1354
    %v1501 = vpop.f32.mrb[0].mxu0
    %v1502 = vadd.f32 0.0, %v1501
    %v1503 = vpop.f32.mrb[0].mxu0
    %1504 = vdwg.mxu0
    %v1505 = vmul.f32 %v1212, %v1427
    %v1506 = vmul.f32 %v1217, %v1432
    %v1507 = vmul.f32 %v1222, %v1437
    %v1508 = vmul.f32 %v1227, %v1442
    %v1509 = vmul.f32 %v1232, %v1447
    %v1510 = vmul.f32 %v1237, %v1452
    %v1511 = vmul.f32 %v1242, %v1457
    %v1512 = vmul.f32 %v1247, %v1462
    %v1513 = vmul.f32 %v1252, %v1467
    %v1514 = vmul.f32 %v1257, %v1472
    %v1515 = vmul.f32 %v1262, %v1477
    %v1516 = vmul.f32 %v1267, %v1482
    %v1517 = vmul.f32 %v1272, %v1487
    %v1518 = vmul.f32 %v1277, %v1492
    %v1519 = vmul.f32 %v1282, %v1497
    %v1520 = vmul.f32 %v1287, %v1502
    %v1521 = vadd.f32 %v71, %v1505
    %v1522 = vadd.f32 %v72, %v1506
    %v1523 = vadd.f32 %v73, %v1507
    %v1524 = vadd.f32 %v74, %v1508
    %v1525 = vadd.f32 %v75, %v1509
    %v1526 = vadd.f32 %v76, %v1510
    %v1527 = vadd.f32 %v77, %v1511
    %v1528 = vadd.f32 %v78, %v1512
    %v1529 = vadd.f32 %v79, %v1513
    %v1530 = vadd.f32 %v80, %v1514
    %v1531 = vadd.f32 %v81, %v1515
    %v1532 = vadd.f32 %v82, %v1516
    %v1533 = vadd.f32 %v83, %v1517
    %v1534 = vadd.f32 %v84, %v1518
    %v1535 = vadd.f32 %v85, %v1519
    %v1536 = vadd.f32 %v86, %v1520
    %1537 = vst [vmem:[#allocation8] sm:$0xff] %v1521
    %1538 = vst [vmem:[#allocation8 + $0x8] sm:$0xff] %v1522
    %1539 = vst [vmem:[#allocation8 + $0x10] sm:$0xff] %v1523
    %1540 = vst [vmem:[#allocation8 + $0x18] sm:$0xff] %v1524
    %1541 = vst [vmem:[#allocation8 + $0x20] sm:$0xff] %v1525
    %1542 = vst [vmem:[#allocation8 + $0x28] sm:$0xff] %v1526
    %1543 = vst [vmem:[#allocation8 + $0x30] sm:$0xff] %v1527
    %1544 = vst [vmem:[#allocation8 + $0x38] sm:$0xff] %v1528
    %1545 = vst [vmem:[#allocation8 + $0x40] sm:$0xff] %v1529
    %1546 = vst [vmem:[#allocation8 + $0x48] sm:$0xff] %v1530
    %1547 = vst [vmem:[#allocation8 + $0x50] sm:$0xff] %v1531
    %1548 = vst [vmem:[#allocation8 + $0x58] sm:$0xff] %v1532
    %1549 = vst [vmem:[#allocation8 + $0x60] sm:$0xff] %v1533
    %1550 = vst [vmem:[#allocation8 + $0x68] sm:$0xff] %v1534
    %1551 = vst [vmem:[#allocation8 + $0x70] sm:$0xff] %v1535
    %1552 = vst [vmem:[#allocation8 + $0x78] sm:$0xff] %v1536
    // Predicated region
    $region46: #{tpu_custom_call.1} parent=1 // pred_check
      _
    $region47: #{tpu_custom_call.1} parent=1 // pred_check_branch
      %1554 = sbr.rel (0) target = $region49
    $region48: #{tpu_custom_call.1} parent=1 // pred_region
      %s1556 = ssub.s32 2048, 2048
      %1557 = vsyncadd [#allocation4], %s1556
      %s1558 = sshll.u32 [#allocation8], 4
      %s1559 = int_to_ptr.vmem [resolvable:$true] %s1558
      %1564 = dma.vmem_to_hbm [thread:$0]  %s1559, 2048, %s8, [#allocation4], 128, 128, 8
    $region49: #{tpu_custom_call.1} parent=1 // pred_fallthru
      _
    // Predicated region
    $region50: #{tpu_custom_call.1} parent=1 // pred_check
      _
    $region51: #{tpu_custom_call.1} parent=1 // pred_check_branch
      %1566 = sbr.rel (0) target = $region53
    $region52: #{tpu_custom_call.1} parent=1 // pred_region
      %1567 = dma.done [#allocation4], 2048
    $region53: #{tpu_custom_call.1} parent=1 // pred_fallthru
      _
    %1568 = vsyncpa [#allocation3], 1
    %1569 = vsyncpa [#allocation6], 1
    %1570 = vsyncpa [#allocation4], 1

</llo_original>
